<compile_context>
chip_gen: v6e
topology: v6e:2x2x1
jax: 0.10.0
libtpu: 0.0.40
codegen_flags: <defaults>
</compile_context>

<pallas_src>
import functools

import jax
import jax.numpy as jnp
from jax import lax
from jax.experimental import pallas as pl
from jax.experimental.pallas import tpu as pltpu


def _round_up(x, m):
    return -(-x // m) * m


# ----------------------------------------------------------------------------
# Pallas kernel (one invocation per (row_block, time_chunk) grid point)
# ----------------------------------------------------------------------------
def _make_manager_kernel(t_total, tc, needs_mask):
    """t_total: true number of timesteps; tc: timesteps per chunk (static)."""

    def kernel(x_ref, h0_ref, c0_ref,
               w1_ref, b1_ref,
               wih_ref, whh_ref, blstm_ref,
               wg_ref, bg_ref,
               feat_ref, goal_ref, hN_ref, cN_ref,
               h_scr, c_scr, gx_scr, out_scr):
        RB, HP = h0_ref.shape            # row-block rows, padded hidden width
        chunk = pl.program_id(1)
        n_chunks = pl.num_programs(1)

        # ---- load the initial hidden state for this row block ---------------
        @pl.when(chunk == 0)
        def _():
            h_scr[...] = h0_ref[...]
            c_scr[...] = c0_ref[...]

        # ---- batched, time-independent matmuls for this chunk ---------------
        feat = jnp.dot(x_ref[...], w1_ref[...],
                       preferred_element_type=jnp.float32)
        feat = jnp.maximum(feat + b1_ref[...], 0.0)          # (tc*RB, HP)
        feat_ref[...] = feat                                  # lane-dense store

        # Input-to-gate contribution for every timestep of the chunk,
        # LSTM bias folded in once.
        gx_scr[...] = (jnp.dot(feat, wih_ref[...],
                               preferred_element_type=jnp.float32)
                       + blstm_ref[...])                      # (tc*RB, 4*HP)

        t0 = chunk * tc                                       # global step offset

        # ---- recurrence: only h_prev @ W_hh stays inside the loop -----------
        def step(t, carry):
            h_prev, c_prev = carry
            r0 = pl.multiple_of(t * RB, RB)                   # tile-aligned rows
            gates = (gx_scr[pl.ds(r0, RB), :]
                     + jnp.dot(h_prev, whh_ref[...],
                               preferred_element_type=jnp.float32))

            # HP % 128 == 0, so all gate slices are vreg-aligned.
            sig_if = jax.nn.sigmoid(gates[:, :2 * HP])        # i, f
            i_g = sig_if[:, :HP]
            f_g = sig_if[:, HP:]
            g_g = jnp.tanh(gates[:, 2 * HP:3 * HP])
            o_g = jax.nn.sigmoid(gates[:, 3 * HP:])

            c_new = f_g * c_prev + i_g * g_g
            h_new = o_g * jnp.tanh(c_new)

            out_scr[pl.ds(r0, RB), :] = h_new                 # LSTM output, step t

            if needs_mask:
                # Time-padded steps must not advance the carried state.
                valid = (t0 + t) < t_total
                h_new = jnp.where(valid, h_new, h_prev)
                c_new = jnp.where(valid, c_new, c_prev)
            return h_new, c_new

        unroll = True if tc <= 8 else 4
        h_fin, c_fin = lax.fori_loop(0, tc, step,
                                     (h_scr[...], c_scr[...]),
                                     unroll=unroll)
        h_scr[...] = h_fin
        c_scr[...] = c_fin

        @pl.when(chunk == n_chunks - 1)
        def _():
            hN_ref[...] = h_fin
            cN_ref[...] = c_fin

        # ---- batched goal projection for the chunk ---------------------------
        goal_ref[...] = (jnp.dot(out_scr[...], wg_ref[...],
                                 preferred_element_type=jnp.float32)
                         + bg_ref[...])                       # (tc*RB, DP)

    return kernel


def _vmem_limit_bytes(tc, rb, f, hp, dp):
    f32 = 4
    rows = tc * rb
    io = 2 * f32 * (                     # conservatively assume double buffers
        rows * f                         # x chunk
        + 2 * rb * hp                    # h0, c0
        + f * hp + hp                    # W1, b1
        + 2 * hp * 4 * hp + 4 * hp       # W_ih, W_hh, b_lstm
        + hp * dp + dp                   # Wg, bg
        + rows * hp + rows * dp          # feat / goal chunks
        + 2 * rb * hp)                   # h_T, c_T
    scratch = f32 * (2 * rb * hp + rows * 4 * hp + rows * hp)
    transient = f32 * (rows * (hp + 4 * hp + dp) + 16 * rb * hp)
    total = io + scratch + transient
    return int(min(max(2 * total + (2 << 20), 16 << 20), 64 << 20))


# ----------------------------------------------------------------------------
# Wrapper
# ----------------------------------------------------------------------------
def _pad2(a, rows, cols):
    return jnp.pad(a, ((0, rows - a.shape[0]), (0, cols - a.shape[1])))


def _pad_gate_cols(w, h, hp):
    """(in, 4*h) -> (in, 4*hp), zero-padding each of the i/f/g/o blocks."""
    in_dim = w.shape[0]
    w4 = w.reshape(in_dim, 4, h)
    w4 = jnp.pad(w4, ((0, 0), (0, 0), (0, hp - h)))
    return w4.reshape(in_dim, 4 * hp)


def feudal_manager_forward(inputs, hidden, params, *, tc=8, num_row_blocks=None):
    """inputs: (T, B, A, feat); hidden: (h0, c0) each (1, B*A, H)."""
    T, B, A, F = inputs.shape
    N = B * A
    H = params["w1"].shape[1]
    D = params["wg"].shape[1]

    HP = _round_up(H, 128)               # lane-dense hidden width
    DP = _round_up(D, 128)               # lane-dense goal width

    # Row-block ("parallel") axis: lets v7x shard the batch rows over 2 TCs.
    if num_row_blocks is None:
        num_row_blocks = 2 if N > 8 else 1
    NRB = num_row_blocks
    NP = _round_up(N, 8 * NRB)
    RB = NP // NRB

    TC = max(1, min(tc, T))
    NC = -(-T // TC)
    TP = NC * TC
    needs_mask = (TP != T)

    f32 = jnp.float32
    x = inputs.reshape(T, N, F).astype(f32)
    x = jnp.pad(x, ((0, TP - T), (0, NP - N), (0, 0)))
    # Row-block-major layout so every (rb, chunk) tile is one contiguous 2-D block.
    x2d = x.reshape(TP, NRB, RB, F).transpose(1, 0, 2, 3).reshape(NRB * TP * RB, F)

    h0 = jnp.pad(hidden[0].reshape(N, H).astype(f32), ((0, NP - N), (0, HP - H)))
    c0 = jnp.pad(hidden[1].reshape(N, H).astype(f32), ((0, NP - N), (0, HP - H)))

    w1 = _pad2(params["w1"].astype(f32), F, HP)
    b1 = _pad2(params["b1"].astype(f32), 1, HP)
    w_ih = jnp.pad(_pad_gate_cols(params["w_ih"].astype(f32), H, HP),
                   ((0, HP - H), (0, 0)))
    w_hh = jnp.pad(_pad_gate_cols(params["w_hh"].astype(f32), H, HP),
                   ((0, HP - H), (0, 0)))
    b_lstm = _pad_gate_cols(params["b_lstm"].astype(f32), H, HP)
    wg = _pad2(params["wg"].astype(f32), HP, DP)
    bg = _pad2(params["bg"].astype(f32), 1, DP)

    rows_chunk = TC * RB

    def const_spec(shape):
        return pl.BlockSpec(shape, lambda rb, c, _s=shape: tuple(0 for _ in _s))

    chunk_map = lambda rb, c: (rb * NC + c, 0)
    row_map = lambda rb, c: (rb, 0)

    out_shapes = (
        jax.ShapeDtypeStruct((NRB * TP * RB, HP), f32),   # features slab
        jax.ShapeDtypeStruct((NRB * TP * RB, DP), f32),   # goal slab
        jax.ShapeDtypeStruct((NP, HP), f32),              # h_T
        jax.ShapeDtypeStruct((NP, HP), f32),              # c_T
    )

    grid_spec = pltpu.PrefetchScalarGridSpec(
        num_scalar_prefetch=0,
        grid=(NRB, NC),
        in_specs=[
            pl.BlockSpec((rows_chunk, F), chunk_map),     # x chunk
            pl.BlockSpec((RB, HP), row_map),              # h0 (row block)
            pl.BlockSpec((RB, HP), row_map),              # c0 (row block)
            const_spec((F, HP)),                          # W1
            const_spec((1, HP)),                          # b1
            const_spec((HP, 4 * HP)),                     # W_ih^T (padded)
            const_spec((HP, 4 * HP)),                     # W_hh^T (padded)
            const_spec((1, 4 * HP)),                      # b_ih + b_hh (padded)
            const_spec((HP, DP)),                         # Wg (padded)
            const_spec((1, DP)),                          # bg (padded)
        ],
        out_specs=[
            pl.BlockSpec((rows_chunk, HP), chunk_map),    # features chunk
            pl.BlockSpec((rows_chunk, DP), chunk_map),    # goal chunk
            pl.BlockSpec((RB, HP), row_map),              # h_T
            pl.BlockSpec((RB, HP), row_map),              # c_T
        ],
        scratch_shapes=[
            pltpu.VMEM((RB, HP), f32),                    # carried h
            pltpu.VMEM((RB, HP), f32),                    # carried c
            pltpu.VMEM((rows_chunk, 4 * HP), f32),        # gates_x for the chunk
            pltpu.VMEM((rows_chunk, HP), f32),            # LSTM outputs for chunk
        ],
    )

    kernel = _make_manager_kernel(T, TC, needs_mask)

    feats_flat, goal_flat, hT_p, cT_p = pl.pallas_call(
        kernel,
        out_shape=out_shapes,
        grid_spec=grid_spec,
        compiler_params=pltpu.CompilerParams(
            dimension_semantics=("parallel", "arbitrary"),
            vmem_limit_bytes=_vmem_limit_bytes(TC, RB, F, HP, DP)),
    )(x2d, h0, c0, w1, b1, w_ih, w_hh, b_lstm, wg, bg)

    feats = feats_flat.reshape(NRB, TP, RB, HP).transpose(1, 0, 2, 3)
    feats = feats.reshape(TP, NP, HP)[:T, :N, :H]
    goals = goal_flat.reshape(NRB, TP, RB, DP).transpose(1, 0, 2, 3)
    goals = goals.reshape(TP, NP, DP)[:T, :N, :D]

    features = feats.reshape(T, B, A, H)
    goal = goals.reshape(T, B, A, D)
    hT = hT_p[:N, :H].reshape(1, N, H)
    cT = cT_p[:N, :H].reshape(1, N, H)
    return features, goal, (hT, cT)


# ----------------------------------------------------------------------------
# Pure-JAX reference (for correctness check)
# ----------------------------------------------------------------------------
def feudal_manager_reference(inputs, hidden, params):
    T, B, A, F = inputs.shape
    N = B * A
    H = params["w1"].shape[1]
    D = params["wg"].shape[1]
    x = inputs.reshape(T, N, F)
    feats = jnp.maximum(x @ params["w1"] + params["b1"], 0.0)   # (T, N, H)

    def step(carry, xt):
        h, c = carry
        gates = xt @ params["w_ih"] + h @ params["w_hh"] + params["b_lstm"]
        i = jax.nn.sigmoid(gates[:, 0:H])
        f = jax.nn.sigmoid(gates[:, H:2 * H])
        g = jnp.tanh(gates[:, 2 * H:3 * H])
        o = jax.nn.sigmoid(gates[:, 3 * H:4 * H])
        c = f * c + i * g
        h = o * jnp.tanh(c)
        return (h, c), h

    h0 = hidden[0].reshape(N, H)
    c0 = hidden[1].reshape(N, H)
    (hT, cT), outs = lax.scan(step, (h0, c0), feats)
    goal = outs @ params["wg"] + params["bg"]
    return (feats.reshape(T, B, A, H), goal.reshape(T, B, A, D),
            (hT.reshape(1, N, H), cT.reshape(1, N, H)))


# ----------------------------------------------------------------------------
# Parameter init (deterministic, PyTorch-style uniform bounds)
# ----------------------------------------------------------------------------
def init_params(key, input_shape, hidden_dim, state_dim_d):
    ks = jax.random.split(key, 8)

    def unif(k, shape, fan_in):
        bound = 1.0 / jnp.sqrt(fan_in)
        return jax.random.uniform(k, shape, jnp.float32, -bound, bound)

    F, H, D = input_shape, hidden_dim, state_dim_d
    params = {
        "w1":     unif(ks[0], (F, H), F),
        "b1":     unif(ks[1], (1, H), F),
        "w_ih":   unif(ks[2], (H, 4 * H), H),   # stored transposed: (in, 4H)
        "w_hh":   unif(ks[3], (H, 4 * H), H),
        "b_lstm": unif(ks[4], (1, 4 * H), H) + unif(ks[5], (1, 4 * H), H),
        "wg":     unif(ks[6], (H, D), H),
        "bg":     unif(ks[7], (1, D), H),
    }
    return params


# ----------------------------------------------------------------------------
if __name__ == "__main__":
    # Small shapes implied by the module's forward pass.
    T, B, A = 8, 2, 3
    input_shape = 16            # feat
    manager_hidden_dim = 32     # H
    state_dim_d = 16            # D

    key = jax.random.PRNGKey(0)
    k_in, k_h, k_c, k_p = jax.random.split(key, 4)

    inputs = jax.random.normal(k_in, (T, B, A, input_shape), jnp.float32)
    N = B * A
    hidden = (0.1 * jax.random.normal(k_h, (1, N, manager_hidden_dim), jnp.float32),
              0.1 * jax.random.normal(k_c, (1, N, manager_hidden_dim), jnp.float32))

    params = init_params(k_p, input_shape, manager_hidden_dim, state_dim_d)

    # tc=4 with T=8 exercises the chunked (pipelined) time axis.
    features, goal, (hT, cT) = feudal_manager_forward(inputs, hidden, params, tc=4)
    jax.block_until_ready((features, goal, hT, cT))

    # Correctness check against a pure-JAX reference.
    f_ref, g_ref, (h_ref, c_ref) = feudal_manager_reference(inputs, hidden, params)
    assert jnp.allclose(features, f_ref, atol=1e-5, rtol=1e-5)
    assert jnp.allclose(goal, g_ref, atol=1e-5, rtol=1e-5)
    assert jnp.allclose(hT, h_ref, atol=1e-5, rtol=1e-5)
    assert jnp.allclose(cT, c_ref, atol=1e-5, rtol=1e-5)

    print("KERNEL_OK")
</pallas_src>

<mosaic_0001>
module attributes {stable_mosaic.version = 11 : i64} {
  func.func @kernel(%arg0: i32, %arg1: i32, %arg2: memref<32x16xf32, #tpu.memory_space<vmem>>, %arg3: memref<8x128xf32, #tpu.memory_space<vmem>>, %arg4: memref<8x128xf32, #tpu.memory_space<vmem>>, %arg5: memref<16x128xf32, #tpu.memory_space<vmem>>, %arg6: memref<1x128xf32, #tpu.memory_space<vmem>>, %arg7: memref<128x512xf32, #tpu.memory_space<vmem>>, %arg8: memref<128x512xf32, #tpu.memory_space<vmem>>, %arg9: memref<1x512xf32, #tpu.memory_space<vmem>>, %arg10: memref<128x128xf32, #tpu.memory_space<vmem>>, %arg11: memref<1x128xf32, #tpu.memory_space<vmem>>, %arg12: memref<32x128xf32, #tpu.memory_space<vmem>>, %arg13: memref<32x128xf32, #tpu.memory_space<vmem>>, %arg14: memref<8x128xf32, #tpu.memory_space<vmem>>, %arg15: memref<8x128xf32, #tpu.memory_space<vmem>>, %arg16: memref<8x128xf32, #tpu.memory_space<vmem>>, %arg17: memref<8x128xf32, #tpu.memory_space<vmem>>, %arg18: memref<32x512xf32, #tpu.memory_space<vmem>>, %arg19: memref<32x128xf32, #tpu.memory_space<vmem>>) attributes {dimension_semantics = [#tpu.dimension_semantics<parallel>, #tpu.dimension_semantics<arbitrary>], iteration_bounds = array<i64: 1, 2>, scalar_prefetch = 0 : i64, scratch_operands = 4 : i64, tpu.core_type = #tpu.core_type<tc>, window_params = [{transform_indices = @transform_0, window_bounds = array<i64: 32, 16>}, {transform_indices = @transform_1, window_bounds = array<i64: 8, 128>}, {transform_indices = @transform_2, window_bounds = array<i64: 8, 128>}, {pipeline_mode = #tpu.pipeline_mode<synchronous>, transform_indices = @transform_3, window_bounds = array<i64: 16, 128>}, {pipeline_mode = #tpu.pipeline_mode<synchronous>, transform_indices = @transform_4, window_bounds = array<i64: 1, 128>}, {pipeline_mode = #tpu.pipeline_mode<synchronous>, transform_indices = @transform_5, window_bounds = array<i64: 128, 512>}, {pipeline_mode = #tpu.pipeline_mode<synchronous>, transform_indices = @transform_6, window_bounds = array<i64: 128, 512>}, {pipeline_mode = #tpu.pipeline_mode<synchronous>, transform_indices = @transform_7, window_bounds = array<i64: 1, 512>}, {pipeline_mode = #tpu.pipeline_mode<synchronous>, transform_indices = @transform_8, window_bounds = array<i64: 128, 128>}, {pipeline_mode = #tpu.pipeline_mode<synchronous>, transform_indices = @transform_9, window_bounds = array<i64: 1, 128>}, {transform_indices = @transform_10, window_bounds = array<i64: 32, 128>}, {transform_indices = @transform_11, window_bounds = array<i64: 32, 128>}, {transform_indices = @transform_12, window_bounds = array<i64: 8, 128>}, {transform_indices = @transform_13, window_bounds = array<i64: 8, 128>}]} {
    %c0_i32 = arith.constant 0 : i32
    %0 = arith.cmpi eq, %arg1, %c0_i32 : i32
    %1 = arith.extui %0 : i1 to i32
    %c0_i32_0 = arith.constant 0 : i32
    %2 = arith.cmpi ne, %1, %c0_i32_0 : i32
    scf.if %2 {
      %c0_67 = arith.constant 0 : index
      %c0_68 = arith.constant 0 : index
      %152 = vector.load %arg3[%c0_67, %c0_68] : memref<8x128xf32, #tpu.memory_space<vmem>>, vector<8x128xf32>
      %c0_69 = arith.constant 0 : index
      %c0_70 = arith.constant 0 : index
      %153 = vector.load %arg16[%c0_69, %c0_70] : memref<8x128xf32, #tpu.memory_space<vmem>>, vector<8x128xf32>
      tpu.vector_store %arg16[%c0_69, %c0_70], %152 {strides = array<i32>} : memref<8x128xf32, #tpu.memory_space<vmem>>, vector<8x128xf32>,
      %c0_71 = arith.constant 0 : index
      %c0_72 = arith.constant 0 : index
      %154 = vector.load %arg4[%c0_71, %c0_72] : memref<8x128xf32, #tpu.memory_space<vmem>>, vector<8x128xf32>
      %c0_73 = arith.constant 0 : index
      %c0_74 = arith.constant 0 : index
      %155 = vector.load %arg17[%c0_73, %c0_74] : memref<8x128xf32, #tpu.memory_space<vmem>>, vector<8x128xf32>
      tpu.vector_store %arg17[%c0_73, %c0_74], %154 {strides = array<i32>} : memref<8x128xf32, #tpu.memory_space<vmem>>, vector<8x128xf32>,
    } else {
    }
    %c0 = arith.constant 0 : index
    %c0_1 = arith.constant 0 : index
    %3 = vector.load %arg2[%c0, %c0_1] : memref<32x16xf32, #tpu.memory_space<vmem>>, vector<32x16xf32>
    %c0_2 = arith.constant 0 : index
    %c0_3 = arith.constant 0 : index
    %4 = vector.load %arg5[%c0_2, %c0_3] : memref<16x128xf32, #tpu.memory_space<vmem>>, vector<16x128xf32>
    %cst = arith.constant dense<0.000000e+00> : vector<32x128xf32>
    %5 = tpu.matmul %3, %4, %cst {dimension_numbers = #tpu.dot_dimension_numbers<[1], [0], [0], [1], [0, 0, 1, 1], [], []>} : vector<32x16xf32>, vector<16x128xf32>, vector<32x128xf32> -> vector<32x128xf32>
    %c0_4 = arith.constant 0 : index
    %c0_5 = arith.constant 0 : index
    %6 = vector.load %arg6[%c0_4, %c0_5] : memref<1x128xf32, #tpu.memory_space<vmem>>, vector<1x128xf32>
    %7 = vector.broadcast %6 : vector<1x128xf32> to vector<32x128xf32>
    %8 = arith.addf %5, %7 : vector<32x128xf32>
    %cst_6 = arith.constant 0.000000e+00 : f32
    %9 = vector.broadcast %cst_6 : f32 to vector<32x128xf32>
    %10 = arith.maximumf %8, %9 : vector<32x128xf32>
    %c0_7 = arith.constant 0 : index
    %c0_8 = arith.constant 0 : index
    %11 = vector.load %arg12[%c0_7, %c0_8] : memref<32x128xf32, #tpu.memory_space<vmem>>, vector<32x128xf32>
    tpu.vector_store %arg12[%c0_7, %c0_8], %10 {strides = array<i32>} : memref<32x128xf32, #tpu.memory_space<vmem>>, vector<32x128xf32>,
    %c0_9 = arith.constant 0 : index
    %c0_10 = arith.constant 0 : index
    %12 = vector.load %arg7[%c0_9, %c0_10] : memref<128x512xf32, #tpu.memory_space<vmem>>, vector<128x512xf32>
    %cst_11 = arith.constant dense<0.000000e+00> : vector<32x512xf32>
    %13 = tpu.matmul %10, %12, %cst_11 {dimension_numbers = #tpu.dot_dimension_numbers<[1], [0], [0], [1], [0, 0, 1, 1], [], []>} : vector<32x128xf32>, vector<128x512xf32>, vector<32x512xf32> -> vector<32x512xf32>
    %c0_12 = arith.constant 0 : index
    %c0_13 = arith.constant 0 : index
    %14 = vector.load %arg9[%c0_12, %c0_13] : memref<1x512xf32, #tpu.memory_space<vmem>>, vector<1x512xf32>
    %15 = vector.broadcast %14 : vector<1x512xf32> to vector<32x512xf32>
    %16 = arith.addf %13, %15 : vector<32x512xf32>
    %c0_14 = arith.constant 0 : index
    %c0_15 = arith.constant 0 : index
    %17 = vector.load %arg18[%c0_14, %c0_15] : memref<32x512xf32, #tpu.memory_space<vmem>>, vector<32x512xf32>
    tpu.vector_store %arg18[%c0_14, %c0_15], %16 {strides = array<i32>} : memref<32x512xf32, #tpu.memory_space<vmem>>, vector<32x512xf32>,
    %c0_16 = arith.constant 0 : index
    %c0_17 = arith.constant 0 : index
    %18 = vector.load %arg16[%c0_16, %c0_17] : memref<8x128xf32, #tpu.memory_space<vmem>>, vector<8x128xf32>
    %c0_18 = arith.constant 0 : index
    %c0_19 = arith.constant 0 : index
    %19 = vector.load %arg17[%c0_18, %c0_19] : memref<8x128xf32, #tpu.memory_space<vmem>>, vector<8x128xf32>
    %c0_i32_20 = arith.constant 0 : i32
    %c8_i32 = arith.constant 8 : i32
    %20 = arith.muli %c0_i32_20, %c8_i32 : i32
    %21 = tpu.assume_multiple %20, 8 : i32
    %22 = arith.index_cast %21 : i32 to index
    %c0_21 = arith.constant 0 : index
    %23 = vector.load %arg18[%22, %c0_21] : memref<32x512xf32, #tpu.memory_space<vmem>>, vector<8x512xf32>
    %c0_22 = arith.constant 0 : index
    %c0_23 = arith.constant 0 : index
    %24 = vector.load %arg8[%c0_22, %c0_23] : memref<128x512xf32, #tpu.memory_space<vmem>>, vector<128x512xf32>
    %cst_24 = arith.constant dense<0.000000e+00> : vector<8x512xf32>
    %25 = tpu.matmul %18, %24, %cst_24 {dimension_numbers = #tpu.dot_dimension_numbers<[1], [0], [0], [1], [0, 0, 1, 1], [], []>} : vector<8x128xf32>, vector<128x512xf32>, vector<8x512xf32> -> vector<8x512xf32>
    %26 = arith.addf %23, %25 : vector<8x512xf32>
    %27 = vector.extract_strided_slice %26 {offsets = [0, 0], sizes = [8, 256], strides = [1, 1]} : vector<8x512xf32> to vector<8x256xf32>
    %28 = arith.negf %27 : vector<8x256xf32>
    %29 = math.exp %28 : vector<8x256xf32>
    %cst_25 = arith.constant 1.000000e+00 : f32
    %30 = vector.broadcast %cst_25 : f32 to vector<8x256xf32>
    %31 = arith.addf %30, %29 : vector<8x256xf32>
    %32 = arith.divf %30, %31 : vector<8x256xf32>
    %33 = vector.extract_strided_slice %32 {offsets = [0, 0], sizes = [8, 128], strides = [1, 1]} : vector<8x256xf32> to vector<8x128xf32>
    %34 = vector.extract_strided_slice %32 {offsets = [0, 128], sizes = [8, 128], strides = [1, 1]} : vector<8x256xf32> to vector<8x128xf32>
    %35 = vector.extract_strided_slice %26 {offsets = [0, 256], sizes = [8, 128], strides = [1, 1]} : vector<8x512xf32> to vector<8x128xf32>
    %36 = math.tanh %35 : vector<8x128xf32>
    %37 = vector.extract_strided_slice %26 {offsets = [0, 384], sizes = [8, 128], strides = [1, 1]} : vector<8x512xf32> to vector<8x128xf32>
    %38 = arith.negf %37 : vector<8x128xf32>
    %39 = math.exp %38 : vector<8x128xf32>
    %cst_26 = arith.constant 1.000000e+00 : f32
    %40 = vector.broadcast %cst_26 : f32 to vector<8x128xf32>
    %41 = arith.addf %40, %39 : vector<8x128xf32>
    %42 = arith.divf %40, %41 : vector<8x128xf32>
    %43 = arith.mulf %34, %19 : vector<8x128xf32>
    %44 = arith.mulf %33, %36 : vector<8x128xf32>
    %45 = arith.addf %43, %44 : vector<8x128xf32>
    %46 = math.tanh %45 : vector<8x128xf32>
    %47 = arith.mulf %42, %46 : vector<8x128xf32>
    %48 = arith.index_cast %21 : i32 to index
    %c0_27 = arith.constant 0 : index
    %49 = vector.load %arg19[%48, %c0_27] : memref<32x128xf32, #tpu.memory_space<vmem>>, vector<8x128xf32>
    tpu.vector_store %arg19[%48, %c0_27], %47 {strides = array<i32>} : memref<32x128xf32, #tpu.memory_space<vmem>>, vector<8x128xf32>,
    %c1_i32 = arith.constant 1 : i32
    %c8_i32_28 = arith.constant 8 : i32
    %50 = arith.muli %c1_i32, %c8_i32_28 : i32
    %51 = tpu.assume_multiple %50, 8 : i32
    %52 = arith.index_cast %51 : i32 to index
    %c0_29 = arith.constant 0 : index
    %53 = vector.load %arg18[%52, %c0_29] : memref<32x512xf32, #tpu.memory_space<vmem>>, vector<8x512xf32>
    %c0_30 = arith.constant 0 : index
    %c0_31 = arith.constant 0 : index
    %54 = vector.load %arg8[%c0_30, %c0_31] : memref<128x512xf32, #tpu.memory_space<vmem>>, vector<128x512xf32>
    %cst_32 = arith.constant dense<0.000000e+00> : vector<8x512xf32>
    %55 = tpu.matmul %47, %54, %cst_32 {dimension_numbers = #tpu.dot_dimension_numbers<[1], [0], [0], [1], [0, 0, 1, 1], [], []>} : vector<8x128xf32>, vector<128x512xf32>, vector<8x512xf32> -> vector<8x512xf32>
    %56 = arith.addf %53, %55 : vector<8x512xf32>
    %57 = vector.extract_strided_slice %56 {offsets = [0, 0], sizes = [8, 256], strides = [1, 1]} : vector<8x512xf32> to vector<8x256xf32>
    %58 = arith.negf %57 : vector<8x256xf32>
    %59 = math.exp %58 : vector<8x256xf32>
    %cst_33 = arith.constant 1.000000e+00 : f32
    %60 = vector.broadcast %cst_33 : f32 to vector<8x256xf32>
    %61 = arith.addf %60, %59 : vector<8x256xf32>
    %62 = arith.divf %60, %61 : vector<8x256xf32>
    %63 = vector.extract_strided_slice %62 {offsets = [0, 0], sizes = [8, 128], strides = [1, 1]} : vector<8x256xf32> to vector<8x128xf32>
    %64 = vector.extract_strided_slice %62 {offsets = [0, 128], sizes = [8, 128], strides = [1, 1]} : vector<8x256xf32> to vector<8x128xf32>
    %65 = vector.extract_strided_slice %56 {offsets = [0, 256], sizes = [8, 128], strides = [1, 1]} : vector<8x512xf32> to vector<8x128xf32>
    %66 = math.tanh %65 : vector<8x128xf32>
    %67 = vector.extract_strided_slice %56 {offsets = [0, 384], sizes = [8, 128], strides = [1, 1]} : vector<8x512xf32> to vector<8x128xf32>
    %68 = arith.negf %67 : vector<8x128xf32>
    %69 = math.exp %68 : vector<8x128xf32>
    %cst_34 = arith.constant 1.000000e+00 : f32
    %70 = vector.broadcast %cst_34 : f32 to vector<8x128xf32>
    %71 = arith.addf %70, %69 : vector<8x128xf32>
    %72 = arith.divf %70, %71 : vector<8x128xf32>
    %73 = arith.mulf %64, %45 : vector<8x128xf32>
    %74 = arith.mulf %63, %66 : vector<8x128xf32>
    %75 = arith.addf %73, %74 : vector<8x128xf32>
    %76 = math.tanh %75 : vector<8x128xf32>
    %77 = arith.mulf %72, %76 : vector<8x128xf32>
    %78 = arith.index_cast %51 : i32 to index
    %c0_35 = arith.constant 0 : index
    %79 = vector.load %arg19[%78, %c0_35] : memref<32x128xf32, #tpu.memory_space<vmem>>, vector<8x128xf32>
    tpu.vector_store %arg19[%78, %c0_35], %77 {strides = array<i32>} : memref<32x128xf32, #tpu.memory_space<vmem>>, vector<8x128xf32>,
    %c2_i32 = arith.constant 2 : i32
    %c8_i32_36 = arith.constant 8 : i32
    %80 = arith.muli %c2_i32, %c8_i32_36 : i32
    %81 = tpu.assume_multiple %80, 8 : i32
    %82 = arith.index_cast %81 : i32 to index
    %c0_37 = arith.constant 0 : index
    %83 = vector.load %arg18[%82, %c0_37] : memref<32x512xf32, #tpu.memory_space<vmem>>, vector<8x512xf32>
    %c0_38 = arith.constant 0 : index
    %c0_39 = arith.constant 0 : index
    %84 = vector.load %arg8[%c0_38, %c0_39] : memref<128x512xf32, #tpu.memory_space<vmem>>, vector<128x512xf32>
    %cst_40 = arith.constant dense<0.000000e+00> : vector<8x512xf32>
    %85 = tpu.matmul %77, %84, %cst_40 {dimension_numbers = #tpu.dot_dimension_numbers<[1], [0], [0], [1], [0, 0, 1, 1], [], []>} : vector<8x128xf32>, vector<128x512xf32>, vector<8x512xf32> -> vector<8x512xf32>
    %86 = arith.addf %83, %85 : vector<8x512xf32>
    %87 = vector.extract_strided_slice %86 {offsets = [0, 0], sizes = [8, 256], strides = [1, 1]} : vector<8x512xf32> to vector<8x256xf32>
    %88 = arith.negf %87 : vector<8x256xf32>
    %89 = math.exp %88 : vector<8x256xf32>
    %cst_41 = arith.constant 1.000000e+00 : f32
    %90 = vector.broadcast %cst_41 : f32 to vector<8x256xf32>
    %91 = arith.addf %90, %89 : vector<8x256xf32>
    %92 = arith.divf %90, %91 : vector<8x256xf32>
    %93 = vector.extract_strided_slice %92 {offsets = [0, 0], sizes = [8, 128], strides = [1, 1]} : vector<8x256xf32> to vector<8x128xf32>
    %94 = vector.extract_strided_slice %92 {offsets = [0, 128], sizes = [8, 128], strides = [1, 1]} : vector<8x256xf32> to vector<8x128xf32>
    %95 = vector.extract_strided_slice %86 {offsets = [0, 256], sizes = [8, 128], strides = [1, 1]} : vector<8x512xf32> to vector<8x128xf32>
    %96 = math.tanh %95 : vector<8x128xf32>
    %97 = vector.extract_strided_slice %86 {offsets = [0, 384], sizes = [8, 128], strides = [1, 1]} : vector<8x512xf32> to vector<8x128xf32>
    %98 = arith.negf %97 : vector<8x128xf32>
    %99 = math.exp %98 : vector<8x128xf32>
    %cst_42 = arith.constant 1.000000e+00 : f32
    %100 = vector.broadcast %cst_42 : f32 to vector<8x128xf32>
    %101 = arith.addf %100, %99 : vector<8x128xf32>
    %102 = arith.divf %100, %101 : vector<8x128xf32>
    %103 = arith.mulf %94, %75 : vector<8x128xf32>
    %104 = arith.mulf %93, %96 : vector<8x128xf32>
    %105 = arith.addf %103, %104 : vector<8x128xf32>
    %106 = math.tanh %105 : vector<8x128xf32>
    %107 = arith.mulf %102, %106 : vector<8x128xf32>
    %108 = arith.index_cast %81 : i32 to index
    %c0_43 = arith.constant 0 : index
    %109 = vector.load %arg19[%108, %c0_43] : memref<32x128xf32, #tpu.memory_space<vmem>>, vector<8x128xf32>
    tpu.vector_store %arg19[%108, %c0_43], %107 {strides = array<i32>} : memref<32x128xf32, #tpu.memory_space<vmem>>, vector<8x128xf32>,
    %c3_i32 = arith.constant 3 : i32
    %c8_i32_44 = arith.constant 8 : i32
    %110 = arith.muli %c3_i32, %c8_i32_44 : i32
    %111 = tpu.assume_multiple %110, 8 : i32
    %112 = arith.index_cast %111 : i32 to index
    %c0_45 = arith.constant 0 : index
    %113 = vector.load %arg18[%112, %c0_45] : memref<32x512xf32, #tpu.memory_space<vmem>>, vector<8x512xf32>
    %c0_46 = arith.constant 0 : index
    %c0_47 = arith.constant 0 : index
    %114 = vector.load %arg8[%c0_46, %c0_47] : memref<128x512xf32, #tpu.memory_space<vmem>>, vector<128x512xf32>
    %cst_48 = arith.constant dense<0.000000e+00> : vector<8x512xf32>
    %115 = tpu.matmul %107, %114, %cst_48 {dimension_numbers = #tpu.dot_dimension_numbers<[1], [0], [0], [1], [0, 0, 1, 1], [], []>} : vector<8x128xf32>, vector<128x512xf32>, vector<8x512xf32> -> vector<8x512xf32>
    %116 = arith.addf %113, %115 : vector<8x512xf32>
    %117 = vector.extract_strided_slice %116 {offsets = [0, 0], sizes = [8, 256], strides = [1, 1]} : vector<8x512xf32> to vector<8x256xf32>
    %118 = arith.negf %117 : vector<8x256xf32>
    %119 = math.exp %118 : vector<8x256xf32>
    %cst_49 = arith.constant 1.000000e+00 : f32
    %120 = vector.broadcast %cst_49 : f32 to vector<8x256xf32>
    %121 = arith.addf %120, %119 : vector<8x256xf32>
    %122 = arith.divf %120, %121 : vector<8x256xf32>
    %123 = vector.extract_strided_slice %122 {offsets = [0, 0], sizes = [8, 128], strides = [1, 1]} : vector<8x256xf32> to vector<8x128xf32>
    %124 = vector.extract_strided_slice %122 {offsets = [0, 128], sizes = [8, 128], strides = [1, 1]} : vector<8x256xf32> to vector<8x128xf32>
    %125 = vector.extract_strided_slice %116 {offsets = [0, 256], sizes = [8, 128], strides = [1, 1]} : vector<8x512xf32> to vector<8x128xf32>
    %126 = math.tanh %125 : vector<8x128xf32>
    %127 = vector.extract_strided_slice %116 {offsets = [0, 384], sizes = [8, 128], strides = [1, 1]} : vector<8x512xf32> to vector<8x128xf32>
    %128 = arith.negf %127 : vector<8x128xf32>
    %129 = math.exp %128 : vector<8x128xf32>
    %cst_50 = arith.constant 1.000000e+00 : f32
    %130 = vector.broadcast %cst_50 : f32 to vector<8x128xf32>
    %131 = arith.addf %130, %129 : vector<8x128xf32>
    %132 = arith.divf %130, %131 : vector<8x128xf32>
    %133 = arith.mulf %124, %105 : vector<8x128xf32>
    %134 = arith.mulf %123, %126 : vector<8x128xf32>
    %135 = arith.addf %133, %134 : vector<8x128xf32>
    %136 = math.tanh %135 : vector<8x128xf32>
    %137 = arith.mulf %132, %136 : vector<8x128xf32>
    %138 = arith.index_cast %111 : i32 to index
    %c0_51 = arith.constant 0 : index
    %139 = vector.load %arg19[%138, %c0_51] : memref<32x128xf32, #tpu.memory_space<vmem>>, vector<8x128xf32>
    tpu.vector_store %arg19[%138, %c0_51], %137 {strides = array<i32>} : memref<32x128xf32, #tpu.memory_space<vmem>>, vector<8x128xf32>,
    %c4_i32 = arith.constant 4 : i32
    %c0_52 = arith.constant 0 : index
    %c0_53 = arith.constant 0 : index
    %140 = vector.load %arg16[%c0_52, %c0_53] : memref<8x128xf32, #tpu.memory_space<vmem>>, vector<8x128xf32>
    tpu.vector_store %arg16[%c0_52, %c0_53], %137 {strides = array<i32>} : memref<8x128xf32, #tpu.memory_space<vmem>>, vector<8x128xf32>,
    %c0_54 = arith.constant 0 : index
    %c0_55 = arith.constant 0 : index
    %141 = vector.load %arg17[%c0_54, %c0_55] : memref<8x128xf32, #tpu.memory_space<vmem>>, vector<8x128xf32>
    tpu.vector_store %arg17[%c0_54, %c0_55], %135 {strides = array<i32>} : memref<8x128xf32, #tpu.memory_space<vmem>>, vector<8x128xf32>,
    %c1_i32_56 = arith.constant 1 : i32
    %142 = arith.cmpi eq, %arg1, %c1_i32_56 : i32
    %143 = arith.extui %142 : i1 to i32
    %c0_i32_57 = arith.constant 0 : i32
    %144 = arith.cmpi ne, %143, %c0_i32_57 : i32
    scf.if %144 {
      %c0_67 = arith.constant 0 : index
      %c0_68 = arith.constant 0 : index
      %152 = vector.load %arg14[%c0_67, %c0_68] : memref<8x128xf32, #tpu.memory_space<vmem>>, vector<8x128xf32>
      tpu.vector_store %arg14[%c0_67, %c0_68], %137 {strides = array<i32>} : memref<8x128xf32, #tpu.memory_space<vmem>>, vector<8x128xf32>,
      %c0_69 = arith.constant 0 : index
      %c0_70 = arith.constant 0 : index
      %153 = vector.load %arg15[%c0_69, %c0_70] : memref<8x128xf32, #tpu.memory_space<vmem>>, vector<8x128xf32>
      tpu.vector_store %arg15[%c0_69, %c0_70], %135 {strides = array<i32>} : memref<8x128xf32, #tpu.memory_space<vmem>>, vector<8x128xf32>,
    } else {
    }
    %c0_58 = arith.constant 0 : index
    %c0_59 = arith.constant 0 : index
    %145 = vector.load %arg19[%c0_58, %c0_59] : memref<32x128xf32, #tpu.memory_space<vmem>>, vector<32x128xf32>
    %c0_60 = arith.constant 0 : index
    %c0_61 = arith.constant 0 : index
    %146 = vector.load %arg10[%c0_60, %c0_61] : memref<128x128xf32, #tpu.memory_space<vmem>>, vector<128x128xf32>
    %cst_62 = arith.constant dense<0.000000e+00> : vector<32x128xf32>
    %147 = tpu.matmul %145, %146, %cst_62 {dimension_numbers = #tpu.dot_dimension_numbers<[1], [0], [0], [1], [0, 0, 1, 1], [], []>} : vector<32x128xf32>, vector<128x128xf32>, vector<32x128xf32> -> vector<32x128xf32>
    %c0_63 = arith.constant 0 : index
    %c0_64 = arith.constant 0 : index
    %148 = vector.load %arg11[%c0_63, %c0_64] : memref<1x128xf32, #tpu.memory_space<vmem>>, vector<1x128xf32>
    %149 = vector.broadcast %148 : vector<1x128xf32> to vector<32x128xf32>
    %150 = arith.addf %147, %149 : vector<32x128xf32>
    %c0_65 = arith.constant 0 : index
    %c0_66 = arith.constant 0 : index
    %151 = vector.load %arg13[%c0_65, %c0_66] : memref<32x128xf32, #tpu.memory_space<vmem>>, vector<32x128xf32>
    tpu.vector_store %arg13[%c0_65, %c0_66], %150 {strides = array<i32>} : memref<32x128xf32, #tpu.memory_space<vmem>>, vector<32x128xf32>,
    return
  }
  func.func @transform_0(%arg0: i32, %arg1: i32) -> (i32, i32) {
    %c2_i32 = arith.constant 2 : i32
    %0 = arith.muli %arg0, %c2_i32 : i32
    %1 = arith.addi %0, %arg1 : i32
    %c0_i32 = arith.constant 0 : i32
    %c0_i32_0 = arith.constant 0 : i32
    return %1, %c0_i32 : i32, i32
  }
  func.func @transform_1(%arg0: i32, %arg1: i32) -> (i32, i32) {
    %c0_i32 = arith.constant 0 : i32
    %c0_i32_0 = arith.constant 0 : i32
    return %arg0, %c0_i32 : i32, i32
  }
  func.func @transform_2(%arg0: i32, %arg1: i32) -> (i32, i32) {
    %c0_i32 = arith.constant 0 : i32
    %c0_i32_0 = arith.constant 0 : i32
    return %arg0, %c0_i32 : i32, i32
  }
  func.func @transform_3(%arg0: i32, %arg1: i32) -> (i32, i32) {
    %c0_i32 = arith.constant 0 : i32
    %c0_i32_0 = arith.constant 0 : i32
    %c0_i32_1 = arith.constant 0 : i32
    return %c0_i32, %c0_i32_0 : i32, i32
  }
  func.func @transform_4(%arg0: i32, %arg1: i32) -> (i32, i32) {
    %c0_i32 = arith.constant 0 : i32
    %c0_i32_0 = arith.constant 0 : i32
    %c0_i32_1 = arith.constant 0 : i32
    return %c0_i32, %c0_i32_0 : i32, i32
  }
  func.func @transform_5(%arg0: i32, %arg1: i32) -> (i32, i32) {
    %c0_i32 = arith.constant 0 : i32
    %c0_i32_0 = arith.constant 0 : i32
    %c0_i32_1 = arith.constant 0 : i32
    return %c0_i32, %c0_i32_0 : i32, i32
  }
  func.func @transform_6(%arg0: i32, %arg1: i32) -> (i32, i32) {
    %c0_i32 = arith.constant 0 : i32
    %c0_i32_0 = arith.constant 0 : i32
    %c0_i32_1 = arith.constant 0 : i32
    return %c0_i32, %c0_i32_0 : i32, i32
  }
  func.func @transform_7(%arg0: i32, %arg1: i32) -> (i32, i32) {
    %c0_i32 = arith.constant 0 : i32
    %c0_i32_0 = arith.constant 0 : i32
    %c0_i32_1 = arith.constant 0 : i32
    return %c0_i32, %c0_i32_0 : i32, i32
  }
  func.func @transform_8(%arg0: i32, %arg1: i32) -> (i32, i32) {
    %c0_i32 = arith.constant 0 : i32
    %c0_i32_0 = arith.constant 0 : i32
    %c0_i32_1 = arith.constant 0 : i32
    return %c0_i32, %c0_i32_0 : i32, i32
  }
  func.func @transform_9(%arg0: i32, %arg1: i32) -> (i32, i32) {
    %c0_i32 = arith.constant 0 : i32
    %c0_i32_0 = arith.constant 0 : i32
    %c0_i32_1 = arith.constant 0 : i32
    return %c0_i32, %c0_i32_0 : i32, i32
  }
  func.func @transform_10(%arg0: i32, %arg1: i32) -> (i32, i32) {
    %c2_i32 = arith.constant 2 : i32
    %0 = arith.muli %arg0, %c2_i32 : i32
    %1 = arith.addi %0, %arg1 : i32
    %c0_i32 = arith.constant 0 : i32
    %c0_i32_0 = arith.constant 0 : i32
    return %1, %c0_i32 : i32, i32
  }
  func.func @transform_11(%arg0: i32, %arg1: i32) -> (i32, i32) {
    %c2_i32 = arith.constant 2 : i32
    %0 = arith.muli %arg0, %c2_i32 : i32
    %1 = arith.addi %0, %arg1 : i32
    %c0_i32 = arith.constant 0 : i32
    %c0_i32_0 = arith.constant 0 : i32
    return %1, %c0_i32 : i32, i32
  }
  func.func @transform_12(%arg0: i32, %arg1: i32) -> (i32, i32) {
    %c0_i32 = arith.constant 0 : i32
    %c0_i32_0 = arith.constant 0 : i32
    return %arg0, %c0_i32 : i32, i32
  }
  func.func @transform_13(%arg0: i32, %arg1: i32) -> (i32, i32) {
    %c0_i32 = arith.constant 0 : i32
    %c0_i32_0 = arith.constant 0 : i32
    return %arg0, %c0_i32 : i32, i32
  }
}

</mosaic_0001>

<llo_original>
// kernel: tpu_custom_call.1
$region0: #{tpu_custom_call.1}
  #allocation0 [shape = 'u32[]', space=smem, size = 0x4, offset = 0x4, fixed_abs, tag = 'smem constant byte address 0x4 - core index']
  #allocation1 [shape = 'u32[144,128]{1,0:T(1,128)}', space=vmem, size = 0x12000, scoped, tag = 'internal scratch']
  #allocation2 [shape = 'f32[8,128]{1,0:T(8,128)}', space=vmem, size = 0x1000, scoped, tag = 'scratch operand']
  #allocation3 [shape = 'f32[8,128]{1,0:T(8,128)}', space=vmem, size = 0x1000, scoped, tag = 'scratch operand']
  #allocation4 [shape = 'f32[32,512]{1,0:T(8,128)}', space=vmem, size = 0x10000, scoped, tag = 'scratch operand']
  #allocation5 [shape = 'f32[32,128]{1,0:T(8,128)}', space=vmem, size = 0x4000, scoped, tag = 'scratch operand']
  %s0 = inlined_call_operand.vmem [shape: f32[64,16], index: 0, kind: input, shape index: {}]
  %s1 = inlined_call_operand.vmem [shape: f32[8,128], index: 1, kind: input, shape index: {}]
  %s2 = inlined_call_operand.vmem [shape: f32[8,128], index: 2, kind: input, shape index: {}]
  %s3 = inlined_call_operand.vmem [shape: f32[16,128], index: 3, kind: input, shape index: {}]
  %s4 = inlined_call_operand.vmem [shape: f32[1,128], index: 4, kind: input, shape index: {}]
  %s5 = inlined_call_operand.hbm [shape: f32[128,512], index: 5, kind: input, shape index: {}]
  %s6 = inlined_call_operand.hbm [shape: f32[128,512], index: 6, kind: input, shape index: {}]
  %s7 = inlined_call_operand.vmem [shape: f32[1,512], index: 7, kind: input, shape index: {}]
  %s8 = inlined_call_operand.hbm [shape: f32[128,128], index: 8, kind: input, shape index: {}]
  %s9 = inlined_call_operand.vmem [shape: f32[1,128], index: 9, kind: input, shape index: {}]
  %s10 = inlined_call_operand.hbm [shape: f32[64,128], index: 10, kind: output, shape index: {0}]
  %s11 = inlined_call_operand.hbm [shape: f32[64,128], index: 11, kind: output, shape index: {1}]
  %s12 = inlined_call_operand.hbm [shape: f32[8,128], index: 12, kind: output, shape index: {2}]
  %s13 = inlined_call_operand.hbm [shape: f32[8,128], index: 13, kind: output, shape index: {3}]
  %14 = xla_tuple %s10, %s11, %s12, %s13
  %s15 = sld [smem:[#allocation0]]
  $region117: #{tpu_custom_call.1} parent=0
    _
  %s17 = ssub.s32 1, %s15
  %s18 = scalar_select 0, %s17, %s15
  $region1: #{tpu_custom_call.1} parent=0
    #allocation6 [shape = 'u8[262144]{0}', space=vmem, size = 0x40000, scoped, tag = 'input window, operand 5, single buffered']
    #allocation7 [shape = 's32[2]{0}', space=sflag, size = 0x8, scoped, tag = 'scoped memory for tpu_custom_call.1']
    #allocation8 [shape = 's32[2]{0}', space=sflag, size = 0x8, scoped, tag = 'scoped memory for tpu_custom_call.1']
    #allocation9 [shape = 'u8[262144]{0}', space=vmem, size = 0x40000, scoped, tag = 'input window, operand 6, single buffered']
    #allocation10 [shape = 's32[1]{0}', space=sflag, size = 0x4, scoped, tag = 'scoped memory for tpu_custom_call.1']
    #allocation11 [shape = 'u8[65536]{0}', space=vmem, size = 0x10000, scoped, tag = 'input window, operand 8, single buffered']
    #allocation12 [shape = 'u8[32768]{0}', space=vmem, size = 0x8000, scoped, tag = 'output window, operand 0']
    #allocation13 [shape = 'u8[32768]{0}', space=vmem, size = 0x8000, scoped, tag = 'output window, operand 1']
    #allocation14 [shape = 's32[2]{0}', space=sflag, size = 0x8, scoped, tag = 'scoped memory for tpu_custom_call.1']
    #allocation15 [shape = 'u8[4096]{0}', space=vmem, size = 0x1000, scoped, tag = 'output window, operand 2, single buffered']
    #allocation16 [shape = 'u8[4096]{0}', space=vmem, size = 0x1000, scoped, tag = 'output window, operand 3, single buffered']
    #allocation17 [shape = 's32[1]{0}', space=sflag, size = 0x4, scoped, tag = 'scoped memory for tpu_custom_call.1']
    %19 = vsyncpa [#allocation7], 0
    %20 = vsyncpa [#allocation10], 0
    %21 = vsyncpa [#allocation8], 0
    %s22 = scalar_lea.sflag [#allocation8], 1
    %23 = vsyncpa %s22, 0
    %24 = vsyncpa [#allocation14], 0
    %s25 = scalar_lea.sflag [#allocation14], 1
    %26 = vsyncpa %s25, 0
    %27 = vsyncpa [#allocation17], 0
    loop: start=0, step=1, limit=4
    $region2: #{tpu_custom_call.1} parent=1 // loop_pre_header
      _
    $region3: #{tpu_custom_call.1} parent=1 // loop_header
      %s29 = sphi 0, %s33
      %p30 = scmp.ge.s32.totalorder %s29, 4
      %s36 = sphi 0, %s48
      %s37 = sphi 0, %s44
      %s38 = sphi 0, %s36
      %s39 = sphi 0, %s37
      %s40 = sphi 0, %s38
      %s41 = sphi 0, %s39
      %s55 = sphi 0, %s57
      %s58 = sphi 0, %s55
      %s59 = sphi 0, %s58
      %s75 = sphi 0, %s59
      %s81 = sphi 0, %s83
      %s84 = sphi 0, %s81
      %s85 = sphi 0, %s84
      %s101 = sphi 0, %s85
      %s107 = sphi 0, %s109
      %s110 = sphi 0, %s107
      %s111 = sphi 0, %s110
      %s127 = sphi 0, %s111
      %s131 = sphi 0, %s131
      %s133 = sphi 0, %s131
      %s134 = sphi 0, %s133
      %s148 = sphi 0, %s134
      %s152 = sphi 0, %s152
      %s154 = sphi 0, %s152
      %s155 = sphi 0, %s154
      %s169 = sphi 0, %s155
      %s173 = sphi 0, %s173
      %s175 = sphi 0, %s173
      %s176 = sphi 0, %s175
      %s190 = sphi 0, %s176
      %s194 = sphi 0, %s194
      %s196 = sphi 0, %s194
      %s197 = sphi 0, %s196
      %s211 = sphi 0, %s197
      %s215 = sphi 0, %s215
      %s217 = sphi 0, %s215
      %s218 = sphi 0, %s217
      %s232 = sphi 0, %s218
      %s236 = sphi 0, %s236
      %s238 = sphi 0, %s236
      %s239 = sphi 0, %s238
      %s253 = sphi 0, %s239
      %s257 = sphi 0, %s257
      %s259 = sphi 0, %s257
      %s260 = sphi 0, %s259
      %s274 = sphi 0, %s260
      %s284 = sphi 0, %s286
      %s287 = sphi 0, %s284
      %s288 = sphi 0, %s287
      %s304 = sphi 0, %s288
      %s314 = sphi 0, %s316
      %s317 = sphi 0, %s314
      %s318 = sphi 0, %s317
      %s334 = sphi 0, %s318
      %s340 = sphi 0, %s342
      %s343 = sphi 0, %s340
      %s344 = sphi 0, %s343
      %s360 = sphi 0, %s344
      %s366 = sphi 0, %s368
      %s369 = sphi 0, %s366
      %s370 = sphi 0, %s369
      %s386 = sphi 0, %s370
    $region4: #{tpu_custom_call.1} parent=1 // loop_header_branch
      %32 = sbr.rel (%p30) target = $region8
    $region5: #{tpu_custom_call.1} parent=1 // loop_body
      %s34 = ssub.s32 %s29, 1
      %s35 = ssub.s32 %s29, 2
      %s42 = sadd.s32 1, %s37
      %p43 = scmp.ge.s32.totalorder %s42, 2
      %s44 = scalar_select %p43, 0, %s42
      %s45 = sadd.s32 1, %s36
      %s46 = scalar_select %p43, %s45, %s36
      %p47 = scmp.ge.s32.totalorder %s46, 1
      %s48 = scalar_select %p47, 0, %s46
      %s49 = smul.u32 %s36, 2
      %s50 = sadd.s32 %s49, %s37
      %s51 = smul.u32 %s48, 2
      %s52 = sadd.s32 %s51, %s44
      %s53 = ssub.s32 %s50, %s52
      %p54 = scmp.eq.s32.totalorder %s53, 0
      %s56 = sadd.s32 %s55, 1
      %s57 = scalar_select %p54, %s55, %s56
      %p60 = pneg %p54
      %p61 = scmp.eq.s32.totalorder %s29, 1
      %p62 = por %p60, %p61
      %p63 = scmp.ne.s32.totalorder %s55, %s58
      %p64 = scmp.eq.s32.totalorder %s29, 0
      %p65 = por %p63, %p64
      %p66 = scmp.ne.s32.totalorder %s55, %s58
      %p67 = scmp.eq.s32.totalorder %s34, 1
      %p68 = por %p66, %p67
      %p69 = scmp.ne.s32.totalorder %s58, %s59
      %p70 = scmp.eq.s32.totalorder %s34, 0
      %p71 = por %p69, %p70
      %p72 = scmp.ne.s32.totalorder %s58, %s59
      %p73 = scmp.eq.s32.totalorder %s35, 1
      %p74 = por %p72, %p73
      %p76 = scmp.ne.s32.totalorder %s59, %s75
      %p77 = scmp.eq.s32.totalorder %s35, 0
      %p78 = por %p76, %p77
      %s79 = ssub.s32 %s36, %s48
      %p80 = scmp.eq.s32.totalorder %s79, 0
      %s82 = sadd.s32 %s81, 1
      %s83 = scalar_select %p80, %s81, %s82
      %p86 = pneg %p80
      %p87 = scmp.eq.s32.totalorder %s29, 1
      %p88 = por %p86, %p87
      %p89 = scmp.ne.s32.totalorder %s81, %s84
      %p90 = scmp.eq.s32.totalorder %s29, 0
      %p91 = por %p89, %p90
      %p92 = scmp.ne.s32.totalorder %s81, %s84
      %p93 = scmp.eq.s32.totalorder %s34, 1
      %p94 = por %p92, %p93
      %p95 = scmp.ne.s32.totalorder %s84, %s85
      %p96 = scmp.eq.s32.totalorder %s34, 0
      %p97 = por %p95, %p96
      %p98 = scmp.ne.s32.totalorder %s84, %s85
      %p99 = scmp.eq.s32.totalorder %s35, 1
      %p100 = por %p98, %p99
      %p102 = scmp.ne.s32.totalorder %s85, %s101
      %p103 = scmp.eq.s32.totalorder %s35, 0
      %p104 = por %p102, %p103
      %s105 = ssub.s32 %s36, %s48
      %p106 = scmp.eq.s32.totalorder %s105, 0
      %s108 = sadd.s32 %s107, 1
      %s109 = scalar_select %p106, %s107, %s108
      %p112 = pneg %p106
      %p113 = scmp.eq.s32.totalorder %s29, 1
      %p114 = por %p112, %p113
      %p115 = scmp.ne.s32.totalorder %s107, %s110
      %p116 = scmp.eq.s32.totalorder %s29, 0
      %p117 = por %p115, %p116
      %p118 = scmp.ne.s32.totalorder %s107, %s110
      %p119 = scmp.eq.s32.totalorder %s34, 1
      %p120 = por %p118, %p119
      %p121 = scmp.ne.s32.totalorder %s110, %s111
      %p122 = scmp.eq.s32.totalorder %s34, 0
      %p123 = por %p121, %p122
      %p124 = scmp.ne.s32.totalorder %s110, %s111
      %p125 = scmp.eq.s32.totalorder %s35, 1
      %p126 = por %p124, %p125
      %p128 = scmp.ne.s32.totalorder %s111, %s127
      %p129 = scmp.eq.s32.totalorder %s35, 0
      %p130 = por %p128, %p129
      %s132 = sadd.s32 %s131, 1
      %p135 = scmp.eq.s32.totalorder %s29, 1
      %p136 = scmp.ne.s32.totalorder %s131, %s133
      %p137 = scmp.eq.s32.totalorder %s29, 0
      %p138 = por %p136, %p137
      %p139 = scmp.ne.s32.totalorder %s131, %s133
      %p140 = scmp.eq.s32.totalorder %s34, 1
      %p141 = por %p139, %p140
      %p142 = scmp.ne.s32.totalorder %s133, %s134
      %p143 = scmp.eq.s32.totalorder %s34, 0
      %p144 = por %p142, %p143
      %p145 = scmp.ne.s32.totalorder %s133, %s134
      %p146 = scmp.eq.s32.totalorder %s35, 1
      %p147 = por %p145, %p146
      %p149 = scmp.ne.s32.totalorder %s134, %s148
      %p150 = scmp.eq.s32.totalorder %s35, 0
      %p151 = por %p149, %p150
      %s153 = sadd.s32 %s152, 1
      %p156 = scmp.eq.s32.totalorder %s29, 1
      %p157 = scmp.ne.s32.totalorder %s152, %s154
      %p158 = scmp.eq.s32.totalorder %s29, 0
      %p159 = por %p157, %p158
      %p160 = scmp.ne.s32.totalorder %s152, %s154
      %p161 = scmp.eq.s32.totalorder %s34, 1
      %p162 = por %p160, %p161
      %p163 = scmp.ne.s32.totalorder %s154, %s155
      %p164 = scmp.eq.s32.totalorder %s34, 0
      %p165 = por %p163, %p164
      %p166 = scmp.ne.s32.totalorder %s154, %s155
      %p167 = scmp.eq.s32.totalorder %s35, 1
      %p168 = por %p166, %p167
      %p170 = scmp.ne.s32.totalorder %s155, %s169
      %p171 = scmp.eq.s32.totalorder %s35, 0
      %p172 = por %p170, %p171
      %s174 = sadd.s32 %s173, 1
      %p177 = scmp.eq.s32.totalorder %s29, 1
      %p178 = scmp.ne.s32.totalorder %s173, %s175
      %p179 = scmp.eq.s32.totalorder %s29, 0
      %p180 = por %p178, %p179
      %p181 = scmp.ne.s32.totalorder %s173, %s175
      %p182 = scmp.eq.s32.totalorder %s34, 1
      %p183 = por %p181, %p182
      %p184 = scmp.ne.s32.totalorder %s175, %s176
      %p185 = scmp.eq.s32.totalorder %s34, 0
      %p186 = por %p184, %p185
      %p187 = scmp.ne.s32.totalorder %s175, %s176
      %p188 = scmp.eq.s32.totalorder %s35, 1
      %p189 = por %p187, %p188
      %p191 = scmp.ne.s32.totalorder %s176, %s190
      %p192 = scmp.eq.s32.totalorder %s35, 0
      %p193 = por %p191, %p192
      %s195 = sadd.s32 %s194, 1
      %p198 = scmp.eq.s32.totalorder %s29, 1
      %p199 = scmp.ne.s32.totalorder %s194, %s196
      %p200 = scmp.eq.s32.totalorder %s29, 0
      %p201 = por %p199, %p200
      %p202 = scmp.ne.s32.totalorder %s194, %s196
      %p203 = scmp.eq.s32.totalorder %s34, 1
      %p204 = por %p202, %p203
      %p205 = scmp.ne.s32.totalorder %s196, %s197
      %p206 = scmp.eq.s32.totalorder %s34, 0
      %p207 = por %p205, %p206
      %p208 = scmp.ne.s32.totalorder %s196, %s197
      %p209 = scmp.eq.s32.totalorder %s35, 1
      %p210 = por %p208, %p209
      %p212 = scmp.ne.s32.totalorder %s197, %s211
      %p213 = scmp.eq.s32.totalorder %s35, 0
      %p214 = por %p212, %p213
      %s216 = sadd.s32 %s215, 1
      %p219 = scmp.eq.s32.totalorder %s29, 1
      %p220 = scmp.ne.s32.totalorder %s215, %s217
      %p221 = scmp.eq.s32.totalorder %s29, 0
      %p222 = por %p220, %p221
      %p223 = scmp.ne.s32.totalorder %s215, %s217
      %p224 = scmp.eq.s32.totalorder %s34, 1
      %p225 = por %p223, %p224
      %p226 = scmp.ne.s32.totalorder %s217, %s218
      %p227 = scmp.eq.s32.totalorder %s34, 0
      %p228 = por %p226, %p227
      %p229 = scmp.ne.s32.totalorder %s217, %s218
      %p230 = scmp.eq.s32.totalorder %s35, 1
      %p231 = por %p229, %p230
      %p233 = scmp.ne.s32.totalorder %s218, %s232
      %p234 = scmp.eq.s32.totalorder %s35, 0
      %p235 = por %p233, %p234
      %s237 = sadd.s32 %s236, 1
      %p240 = scmp.eq.s32.totalorder %s29, 1
      %p241 = scmp.ne.s32.totalorder %s236, %s238
      %p242 = scmp.eq.s32.totalorder %s29, 0
      %p243 = por %p241, %p242
      %p244 = scmp.ne.s32.totalorder %s236, %s238
      %p245 = scmp.eq.s32.totalorder %s34, 1
      %p246 = por %p244, %p245
      %p247 = scmp.ne.s32.totalorder %s238, %s239
      %p248 = scmp.eq.s32.totalorder %s34, 0
      %p249 = por %p247, %p248
      %p250 = scmp.ne.s32.totalorder %s238, %s239
      %p251 = scmp.eq.s32.totalorder %s35, 1
      %p252 = por %p250, %p251
      %p254 = scmp.ne.s32.totalorder %s239, %s253
      %p255 = scmp.eq.s32.totalorder %s35, 0
      %p256 = por %p254, %p255
      %s258 = sadd.s32 %s257, 1
      %p261 = scmp.eq.s32.totalorder %s29, 1
      %p262 = scmp.ne.s32.totalorder %s257, %s259
      %p263 = scmp.eq.s32.totalorder %s29, 0
      %p264 = por %p262, %p263
      %p265 = scmp.ne.s32.totalorder %s257, %s259
      %p266 = scmp.eq.s32.totalorder %s34, 1
      %p267 = por %p265, %p266
      %p268 = scmp.ne.s32.totalorder %s259, %s260
      %p269 = scmp.eq.s32.totalorder %s34, 0
      %p270 = por %p268, %p269
      %p271 = scmp.ne.s32.totalorder %s259, %s260
      %p272 = scmp.eq.s32.totalorder %s35, 1
      %p273 = por %p271, %p272
      %p275 = scmp.ne.s32.totalorder %s260, %s274
      %p276 = scmp.eq.s32.totalorder %s35, 0
      %p277 = por %p275, %p276
      %s278 = smul.u32 %s36, 2
      %s279 = sadd.s32 %s278, %s37
      %s280 = smul.u32 %s48, 2
      %s281 = sadd.s32 %s280, %s44
      %s282 = ssub.s32 %s279, %s281
      %p283 = scmp.eq.s32.totalorder %s282, 0
      %s285 = sadd.s32 %s284, 1
      %s286 = scalar_select %p283, %s284, %s285
      %p289 = pneg %p283
      %p290 = scmp.eq.s32.totalorder %s29, 1
      %p291 = por %p289, %p290
      %p292 = scmp.ne.s32.totalorder %s284, %s287
      %p293 = scmp.eq.s32.totalorder %s29, 0
      %p294 = por %p292, %p293
      %p295 = scmp.ne.s32.totalorder %s284, %s287
      %p296 = scmp.eq.s32.totalorder %s34, 1
      %p297 = por %p295, %p296
      %p298 = scmp.ne.s32.totalorder %s287, %s288
      %p299 = scmp.eq.s32.totalorder %s34, 0
      %p300 = por %p298, %p299
      %p301 = scmp.ne.s32.totalorder %s287, %s288
      %p302 = scmp.eq.s32.totalorder %s35, 1
      %p303 = por %p301, %p302
      %p305 = scmp.ne.s32.totalorder %s288, %s304
      %p306 = scmp.eq.s32.totalorder %s35, 0
      %p307 = por %p305, %p306
      %s308 = smul.u32 %s36, 2
      %s309 = sadd.s32 %s308, %s37
      %s310 = smul.u32 %s48, 2
      %s311 = sadd.s32 %s310, %s44
      %s312 = ssub.s32 %s309, %s311
      %p313 = scmp.eq.s32.totalorder %s312, 0
      %s315 = sadd.s32 %s314, 1
      %s316 = scalar_select %p313, %s314, %s315
      %p319 = pneg %p313
      %p320 = scmp.eq.s32.totalorder %s29, 1
      %p321 = por %p319, %p320
      %p322 = scmp.ne.s32.totalorder %s314, %s317
      %p323 = scmp.eq.s32.totalorder %s29, 0
      %p324 = por %p322, %p323
      %p325 = scmp.ne.s32.totalorder %s314, %s317
      %p326 = scmp.eq.s32.totalorder %s34, 1
      %p327 = por %p325, %p326
      %p328 = scmp.ne.s32.totalorder %s317, %s318
      %p329 = scmp.eq.s32.totalorder %s34, 0
      %p330 = por %p328, %p329
      %p331 = scmp.ne.s32.totalorder %s317, %s318
      %p332 = scmp.eq.s32.totalorder %s35, 1
      %p333 = por %p331, %p332
      %p335 = scmp.ne.s32.totalorder %s318, %s334
      %p336 = scmp.eq.s32.totalorder %s35, 0
      %p337 = por %p335, %p336
      %s338 = ssub.s32 %s36, %s48
      %p339 = scmp.eq.s32.totalorder %s338, 0
      %s341 = sadd.s32 %s340, 1
      %s342 = scalar_select %p339, %s340, %s341
      %p345 = pneg %p339
      %p346 = scmp.eq.s32.totalorder %s29, 1
      %p347 = por %p345, %p346
      %p348 = scmp.ne.s32.totalorder %s340, %s343
      %p349 = scmp.eq.s32.totalorder %s29, 0
      %p350 = por %p348, %p349
      %p351 = scmp.ne.s32.totalorder %s340, %s343
      %p352 = scmp.eq.s32.totalorder %s34, 1
      %p353 = por %p351, %p352
      %p354 = scmp.ne.s32.totalorder %s343, %s344
      %p355 = scmp.eq.s32.totalorder %s34, 0
      %p356 = por %p354, %p355
      %p357 = scmp.ne.s32.totalorder %s343, %s344
      %p358 = scmp.eq.s32.totalorder %s35, 1
      %p359 = por %p357, %p358
      %p361 = scmp.ne.s32.totalorder %s344, %s360
      %p362 = scmp.eq.s32.totalorder %s35, 0
      %p363 = por %p361, %p362
      %s364 = ssub.s32 %s36, %s48
      %p365 = scmp.eq.s32.totalorder %s364, 0
      %s367 = sadd.s32 %s366, 1
      %s368 = scalar_select %p365, %s366, %s367
      %p371 = pneg %p365
      %p372 = scmp.eq.s32.totalorder %s29, 1
      %p373 = por %p371, %p372
      %p374 = scmp.ne.s32.totalorder %s366, %s369
      %p375 = scmp.eq.s32.totalorder %s29, 0
      %p376 = por %p374, %p375
      %p377 = scmp.ne.s32.totalorder %s366, %s369
      %p378 = scmp.eq.s32.totalorder %s34, 1
      %p379 = por %p377, %p378
      %p380 = scmp.ne.s32.totalorder %s369, %s370
      %p381 = scmp.eq.s32.totalorder %s34, 0
      %p382 = por %p380, %p381
      %p383 = scmp.ne.s32.totalorder %s369, %s370
      %p384 = scmp.eq.s32.totalorder %s35, 1
      %p385 = por %p383, %p384
      %p387 = scmp.ne.s32.totalorder %s370, %s386
      %p388 = scmp.eq.s32.totalorder %s35, 0
      %p389 = por %p387, %p388
      %p390 = scmp.le.s32.totalorder 1, %s29
      %p391 = scmp.lt.s32.totalorder %s29, 3
      %p392 = pnand %p390, %p391
      %p393 = pneg %p392
      // Predicated region
      $region9: #{tpu_custom_call.1} parent=5 // pred_check
        _
      $region10: #{tpu_custom_call.1} parent=5 // pred_check_branch
        %395 = sbr.rel (%p392) target = $region12
      $region11: #{tpu_custom_call.1} parent=5 // pred_region
        %s396 = ssub.s32 %s29, 1
        // Predicated region
        $region13: #{tpu_custom_call.1} parent=11 // pred_check
          %p397 = pneg %p97
        $region14: #{tpu_custom_call.1} parent=11 // pred_check_branch
          %399 = sbr.rel (%p397) target = $region16
        $region15: #{tpu_custom_call.1} parent=11 // pred_region
          %p400 = scmp.lt.s32.totalorder %s38, 0
          %s401 = scalar_select %p400, %s38, 0
          %s402 = smul.addr %s401, 8
          %s403 = scalar_lea.vmem %s1, %s402
        $region16: #{tpu_custom_call.1} parent=11 // pred_fallthru
          _
        // Predicated region
        $region17: #{tpu_custom_call.1} parent=11 // pred_check
          %p404 = pneg %p123
        $region18: #{tpu_custom_call.1} parent=11 // pred_check_branch
          %406 = sbr.rel (%p404) target = $region20
        $region19: #{tpu_custom_call.1} parent=11 // pred_region
          %p407 = scmp.lt.s32.totalorder %s38, 0
          %s408 = scalar_select %p407, %s38, 0
          %s409 = smul.addr %s408, 8
          %s410 = scalar_lea.vmem %s2, %s409
        $region20: #{tpu_custom_call.1} parent=11 // pred_fallthru
          _
        // Predicated region
        $region21: #{tpu_custom_call.1} parent=11 // pred_check
          %p411 = pneg %p144
        $region22: #{tpu_custom_call.1} parent=11 // pred_check_branch
          %413 = sbr.rel (%p411) target = $region24
        $region23: #{tpu_custom_call.1} parent=11 // pred_region
          _
        $region24: #{tpu_custom_call.1} parent=11 // pred_fallthru
          _
        // Predicated region
        $region25: #{tpu_custom_call.1} parent=11 // pred_check
          %p414 = pneg %p165
        $region26: #{tpu_custom_call.1} parent=11 // pred_check_branch
          %416 = sbr.rel (%p414) target = $region28
        $region27: #{tpu_custom_call.1} parent=11 // pred_region
          _
        $region28: #{tpu_custom_call.1} parent=11 // pred_fallthru
          _
        // Predicated region
        $region29: #{tpu_custom_call.1} parent=11 // pred_check
          %p417 = pneg %p186
        $region30: #{tpu_custom_call.1} parent=11 // pred_check_branch
          %419 = sbr.rel (%p417) target = $region32
        $region31: #{tpu_custom_call.1} parent=11 // pred_region
          %s421 = ssub.s32 8192, 8192
          %422 = vsyncadd [#allocation7], %s421
          %s423 = sshll.u32 [#allocation6], 4
          %s424 = int_to_ptr.vmem [resolvable:$true] %s423
          %429 = dma.hbm_to_vmem [thread:$0]  %s5, 8192, %s424, [#allocation7], 512, 512, 32
        $region32: #{tpu_custom_call.1} parent=11 // pred_fallthru
          _
        // Predicated region
        $region33: #{tpu_custom_call.1} parent=11 // pred_check
          %p430 = pneg %p207
        $region34: #{tpu_custom_call.1} parent=11 // pred_check_branch
          %432 = sbr.rel (%p430) target = $region36
        $region35: #{tpu_custom_call.1} parent=11 // pred_region
          %s434 = ssub.s32 8192, 8192
          %435 = vsyncadd [#allocation10], %s434
          %s436 = sshll.u32 [#allocation9], 4
          %s437 = int_to_ptr.vmem [resolvable:$true] %s436
          %442 = dma.hbm_to_vmem [thread:$0]  %s6, 8192, %s437, [#allocation10], 512, 512, 32
        $region36: #{tpu_custom_call.1} parent=11 // pred_fallthru
          _
        // Predicated region
        $region37: #{tpu_custom_call.1} parent=11 // pred_check
          %p443 = pneg %p228
        $region38: #{tpu_custom_call.1} parent=11 // pred_check_branch
          %445 = sbr.rel (%p443) target = $region40
        $region39: #{tpu_custom_call.1} parent=11 // pred_region
          _
        $region40: #{tpu_custom_call.1} parent=11 // pred_fallthru
          _
        // Predicated region
        $region41: #{tpu_custom_call.1} parent=11 // pred_check
          %p446 = pneg %p249
        $region42: #{tpu_custom_call.1} parent=11 // pred_check_branch
          %448 = sbr.rel (%p446) target = $region44
        $region43: #{tpu_custom_call.1} parent=11 // pred_region
          %s450 = ssub.s32 2048, 2048
          %451 = vsyncadd [#allocation10], %s450
          %s452 = sshll.u32 [#allocation11], 4
          %s453 = int_to_ptr.vmem [resolvable:$true] %s452
          %458 = dma.hbm_to_vmem [thread:$0]  %s8, 2048, %s453, [#allocation10], 128, 128, 8
        $region44: #{tpu_custom_call.1} parent=11 // pred_fallthru
          _
        // Predicated region
        $region45: #{tpu_custom_call.1} parent=11 // pred_check
          %p459 = pneg %p270
        $region46: #{tpu_custom_call.1} parent=11 // pred_check_branch
          %461 = sbr.rel (%p459) target = $region48
        $region47: #{tpu_custom_call.1} parent=11 // pred_region
          _
        $region48: #{tpu_custom_call.1} parent=11 // pred_fallthru
          _
      $region12: #{tpu_custom_call.1} parent=5 // pred_fallthru
        _
      %p462 = scmp.lt.s32.totalorder %s29, 2
      // Predicated region
      $region49: #{tpu_custom_call.1} parent=5 // pred_check
        %p463 = pneg %p462
      $region50: #{tpu_custom_call.1} parent=5 // pred_check_branch
        %465 = sbr.rel (%p463) target = $region52
      $region51: #{tpu_custom_call.1} parent=5 // pred_region
        // Predicated region
        $region53: #{tpu_custom_call.1} parent=51 // pred_check
          %p466 = pneg %p65
        $region54: #{tpu_custom_call.1} parent=51 // pred_check_branch
          %468 = sbr.rel (%p466) target = $region56
        $region55: #{tpu_custom_call.1} parent=51 // pred_region
          %s469 = smul.u32 %s36, 2
          %s470 = sadd.s32 %s469, %s37
          %s471 = smul.u32 4, %s470
          %p472 = scmp.lt.s32.totalorder %s471, 7
          %s473 = scalar_select %p472, %s471, 7
          %s474 = smul.addr %s473, 8
          %s475 = scalar_lea.vmem %s0, %s474
          %s476 = smul.u32 %s36, 2
          %s477 = sadd.s32 %s476, %s37
          %s478 = smul.u32 4, %s477
        $region56: #{tpu_custom_call.1} parent=51 // pred_fallthru
          _
      $region52: #{tpu_custom_call.1} parent=5 // pred_fallthru
        _
      %p479 = scmp.le.s32.totalorder 1, %s29
      %p480 = scmp.lt.s32.totalorder %s29, 3
      %p481 = pnand %p479, %p480
      %p482 = pneg %p481
      // Predicated region
      $region57: #{tpu_custom_call.1} parent=5 // pred_check
        _
      $region58: #{tpu_custom_call.1} parent=5 // pred_check_branch
        %484 = sbr.rel (%p481) target = $region60
      $region59: #{tpu_custom_call.1} parent=5 // pred_region
        %s485 = ssub.s32 %s29, 1
        // Predicated region
        $region61: #{tpu_custom_call.1} parent=59 // pred_check
          %p486 = pneg %p186
        $region62: #{tpu_custom_call.1} parent=59 // pred_check_branch
          %488 = sbr.rel (%p486) target = $region64
        $region63: #{tpu_custom_call.1} parent=59 // pred_region
          %489 = dma.done [#allocation7], 8192
        $region64: #{tpu_custom_call.1} parent=59 // pred_fallthru
          _
        // Predicated region
        $region65: #{tpu_custom_call.1} parent=59 // pred_check
          %p490 = pneg %p207
        $region66: #{tpu_custom_call.1} parent=59 // pred_check_branch
          %492 = sbr.rel (%p490) target = $region68
        $region67: #{tpu_custom_call.1} parent=59 // pred_region
          %493 = dma.done [#allocation10], 8192
        $region68: #{tpu_custom_call.1} parent=59 // pred_fallthru
          _
        // Predicated region
        $region69: #{tpu_custom_call.1} parent=59 // pred_check
          %p494 = pneg %p249
        $region70: #{tpu_custom_call.1} parent=59 // pred_check_branch
          %496 = sbr.rel (%p494) target = $region72
        $region71: #{tpu_custom_call.1} parent=59 // pred_region
          %497 = dma.done [#allocation10], 2048
        $region72: #{tpu_custom_call.1} parent=59 // pred_fallthru
          _
        %s498 = smul.u32 %s38, 2
        %s499 = sadd.s32 %s498, %s39
        %s500 = smul.u32 4, %s499
        %p501 = scmp.lt.s32.totalorder %s500, 7
        %s502 = scalar_select %p501, %s500, 7
        %s503 = smul.addr %s502, 8
        %s504 = scalar_lea.vmem %s0, %s503
        %p505 = pneg %p71
        %p506 = pneg %p68
        %p507 = scmp.lt.s32.totalorder %s38, 0
        %s508 = scalar_select %p507, %s38, 0
        %s509 = smul.addr %s508, 8
        %s510 = scalar_lea.vmem %s1, %s509
        %p511 = pneg %p97
        %p512 = pneg %p94
        %p513 = scmp.lt.s32.totalorder %s38, 0
        %s514 = scalar_select %p513, %s38, 0
        %s515 = smul.addr %s514, 8
        %s516 = scalar_lea.vmem %s2, %s515
        %p517 = pneg %p123
        %p518 = pneg %p120
        %p519 = pneg %p144
        %p520 = pneg %p141
        %p521 = pneg %p165
        %p522 = pneg %p162
        %p523 = pneg %p186
        %p524 = pneg %p183
        %p525 = pneg %p207
        %p526 = pneg %p204
        %p527 = pneg %p228
        %p528 = pneg %p225
        %p529 = pneg %p249
        %p530 = pneg %p246
        %p531 = pneg %p270
        %p532 = pneg %p267
        %p533 = pneg %p300
        %p534 = pneg %p297
        %s535 = sand.u32 %s287, 1
        %s536 = scalar_lea.sflag [#allocation8], %s535
        %s537 = sand.u32 %s287, 1
        %s538 = smul.addr %s537, 32
        %s539 = scalar_lea.vmem [#allocation12], %s538
        %p540 = pneg %p330
        %p541 = pneg %p327
        %s542 = sand.u32 %s34, 1
        %s543 = scalar_lea.sflag [#allocation14], %s542
        %s544 = sand.u32 %s317, 1
        %s545 = smul.addr %s544, 32
        %s546 = scalar_lea.vmem [#allocation13], %s545
        %p547 = pneg %p356
        %p548 = pneg %p353
        %p549 = pneg %p382
        %p550 = pneg %p379
        %s551 = smul.u32 %s38, 2
        %s552 = sadd.s32 %s551, %s39
        %s553 = smul.u32 4, %s552
        %p554 = scmp.lt.s32.totalorder %s553, 7
        %s555 = scalar_select %p554, %s553, 7
        %s556 = smul.addr %s555, 8
        %s557 = scalar_lea.vmem %s0, %s556
        %s558 = smul.u32 %s38, 2
        %s559 = sadd.s32 %s558, %s39
        %s560 = smul.u32 4, %s559
        %p561 = scmp.lt.s32.totalorder %s38, 0
        %s562 = scalar_select %p561, %s38, 0
        %s563 = smul.addr %s562, 8
        %s564 = scalar_lea.vmem %s1, %s563
        %p565 = scmp.lt.s32.totalorder %s38, 0
        %s566 = scalar_select %p565, %s38, 0
        %s567 = smul.addr %s566, 8
        %s568 = scalar_lea.vmem %s2, %s567
        %s569 = smul.u32 %s38, 2
        %s570 = sadd.s32 %s569, %s39
        %s571 = smul.u32 4, %s570
        %s572 = smul.u32 %s38, 2
        %s573 = sadd.s32 %s572, %s39
        %s574 = smul.u32 4, %s573
        %p575 = scmp.eq.s32.totalorder %s39, 0
        // Predicated region
        $region73: #{tpu_custom_call.1} parent=59 // pred_check
          %p576 = pneg %p575
        $region74: #{tpu_custom_call.1} parent=59 // pred_check_branch
          %578 = sbr.rel (%p576) target = $region76
        $region75: #{tpu_custom_call.1} parent=59 // pred_region
          %v579 = vld [vmem:[%s564] sm:$0xff]
          %580 = vst [vmem:[#allocation2] sm:$0xff] %v579
          %v581 = vld [vmem:[%s568] sm:$0xff]
          %582 = vst [vmem:[#allocation3] sm:$0xff] %v581
        $region76: #{tpu_custom_call.1} parent=59 // pred_fallthru
          _
        %v583 = vld [vmem:[%s557] sm:$0xff]
        %v584 = vld [vmem:[%s557 + $0x8] sm:$0xff]
        %v585 = vld [vmem:[%s557 + $0x10] sm:$0xff]
        %v586 = vld [vmem:[%s557 + $0x18] sm:$0xff]
        %v587 = vld [vmem:[%s3] sm:$0xff]
        %v588 = vld [vmem:[%s3 + $0x8] sm:$0xff]
        %v589 = vld [vmem:[%s4] sm:$0x1]
        %v591 = vlaneseq
        %v592 = vshrl.u32 %v591, 7
        %v593 = vsub.s32 0, %v592
        %v594 = vrot.slane %v589, %v593
        %vm596 = vcmask 130048
        %v598 = vsel %vm596, %v583, 0
        %v601 = vsel %vm596, %v584, 0
        %v604 = vsel %vm596, %v585, 0
        %v607 = vsel %vm596, %v586, 0
        %609 = vmatprep.subr.mxu0 0.0
        %610 = vmatpush1.msra.mxu0 0.0
        %611 = vmatprep.subr.mxu0 0.0
        %612 = vmatpush1.msra.mxu0 0.0
        %613 = vmatprep.subr.mxu0 0.0
        %614 = vmatpush1.msra.mxu0 0.0
        %615 = vmatprep.subr.mxu0 0.0
        %616 = vmatpush1.msra.mxu0 0.0
        %617 = vmatprep.subr.mxu0 0.0
        %618 = vmatpush1.msra.mxu0 0.0
        %619 = vmatprep.subr.mxu0 0.0
        %620 = vmatpush1.msra.mxu0 0.0
        %621 = vmatprep.subr.mxu0 0.0
        %622 = vmatpush1.msra.mxu0 0.0
        %623 = vmatprep.subr.mxu0 0.0
        %624 = vmatpush1.msra.mxu0 0.0
        %625 = vmatprep.subr.mxu0 0.0
        %626 = vmatpush1.msra.mxu0 0.0
        %627 = vmatprep.subr.mxu0 0.0
        %628 = vmatpush1.msra.mxu0 0.0
        %629 = vmatprep.subr.mxu0 0.0
        %630 = vmatpush1.msra.mxu0 0.0
        %631 = vmatprep.subr.mxu0 0.0
        %632 = vmatpush1.msra.mxu0 0.0
        %633 = vmatprep.subr.mxu0 0.0
        %634 = vmatpush1.msra.mxu0 0.0
        %635 = vmatprep.subr.mxu0 0.0
        %636 = vmatpush1.msra.mxu0 0.0
        %637 = vmatprep.subr.mxu0 0.0
        %638 = vmatpush1.msra.mxu0 %v588
        %639 = vmatprep.subr.mxu0 0.0
        %640 = vmatpush1.msra.mxu0 %v587
        %641 = vmatprep.subr.mxu0 0.0
        %642 = vmatpush2.msra.mxu0 0.0
        %643 = vmatprep.subr.mxu0 0.0
        %644 = vmatpush2.msra.mxu0 0.0
        %645 = vmatprep.subr.mxu0 0.0
        %646 = vmatpush2.msra.mxu0 0.0
        %647 = vmatprep.subr.mxu0 0.0
        %648 = vmatpush2.msra.mxu0 0.0
        %649 = vmatprep.subr.mxu0 0.0
        %650 = vmatpush2.msra.mxu0 0.0
        %651 = vmatprep.subr.mxu0 0.0
        %652 = vmatpush2.msra.mxu0 0.0
        %653 = vmatprep.subr.mxu0 0.0
        %654 = vmatpush2.msra.mxu0 0.0
        %655 = vmatprep.subr.mxu0 0.0
        %656 = vmatpush2.msra.mxu0 0.0
        %657 = vmatprep.subr.mxu0 0.0
        %658 = vmatpush2.msra.mxu0 0.0
        %659 = vmatprep.subr.mxu0 0.0
        %660 = vmatpush2.msra.mxu0 0.0
        %661 = vmatprep.subr.mxu0 0.0
        %662 = vmatpush2.msra.mxu0 0.0
        %663 = vmatprep.subr.mxu0 0.0
        %664 = vmatpush2.msra.mxu0 0.0
        %665 = vmatprep.subr.mxu0 0.0
        %666 = vmatpush2.msra.mxu0 0.0
        %667 = vmatprep.subr.mxu0 0.0
        %668 = vmatpush2.msra.mxu0 0.0
        %669 = vmatprep.subr.mxu0 0.0
        %670 = vmatpush2.msra.mxu0 0.0
        %671 = vmatprep.subr.mxu0 0.0
        %672 = vmatpush2.msra.mxu0 0.0
        %673 = vmatprep.mubr.f32.mxu0 0.0
        %674 = vmatmul.mubr.f32.gmra.mxu0 %v598
        %v675 = vpop.f32.mrf.mxu0
        %v676 = vadd.f32 %v594, %v675
        %v677 = vpop.f32.mrf.mxu0
        %678 = vmatprep.mubr.f32.mxu0 0.0
        %679 = vmatmul.mubr.f32.gmra.mxu0 %v601
        %v680 = vpop.f32.mrf.mxu0
        %v681 = vadd.f32 %v594, %v680
        %v682 = vpop.f32.mrf.mxu0
        %683 = vmatprep.mubr.f32.mxu0 0.0
        %684 = vmatmul.mubr.f32.gmra.mxu0 %v604
        %v685 = vpop.f32.mrf.mxu0
        %v686 = vadd.f32 %v594, %v685
        %v687 = vpop.f32.mrf.mxu0
        %688 = vmatprep.mubr.f32.mxu0 0.0
        %689 = vmatmul.mubr.f32.gmra.mxu0 %v607
        %v690 = vpop.f32.mrf.mxu0
        %v691 = vadd.f32 %v594, %v690
        %v692 = vpop.f32.mrf.mxu0
        %693 = vdwg.mxu0
        %v694 = vmax.f32 %v676, 0.0
        %v695 = vmax.f32 %v681, 0.0
        %v696 = vmax.f32 %v686, 0.0
        %v697 = vmax.f32 %v691, 0.0
        %698 = vst [vmem:[%s539] sm:$0xff] %v694
        %699 = vst [vmem:[%s539 + $0x8] sm:$0xff] %v695
        %700 = vst [vmem:[%s539 + $0x10] sm:$0xff] %v696
        %701 = vst [vmem:[%s539 + $0x18] sm:$0xff] %v697
        %v702 = vld [vmem:[#allocation6] sm:$0xff]
        %v703 = vld [vmem:[#allocation6 + $0x8] sm:$0xff]
        %v704 = vld [vmem:[#allocation6 + $0x10] sm:$0xff]
        %v705 = vld [vmem:[#allocation6 + $0x18] sm:$0xff]
        %v706 = vld [vmem:[#allocation6 + $0x20] sm:$0xff]
        %v707 = vld [vmem:[#allocation6 + $0x28] sm:$0xff]
        %v708 = vld [vmem:[#allocation6 + $0x30] sm:$0xff]
        %v709 = vld [vmem:[#allocation6 + $0x38] sm:$0xff]
        %v710 = vld [vmem:[#allocation6 + $0x40] sm:$0xff]
        %v711 = vld [vmem:[#allocation6 + $0x48] sm:$0xff]
        %v712 = vld [vmem:[#allocation6 + $0x50] sm:$0xff]
        %v713 = vld [vmem:[#allocation6 + $0x58] sm:$0xff]
        %v714 = vld [vmem:[#allocation6 + $0x60] sm:$0xff]
        %v715 = vld [vmem:[#allocation6 + $0x68] sm:$0xff]
        %v716 = vld [vmem:[#allocation6 + $0x70] sm:$0xff]
        %v717 = vld [vmem:[#allocation6 + $0x78] sm:$0xff]
        %v718 = vld [vmem:[#allocation6 + $0x80] sm:$0xff]
        %v719 = vld [vmem:[#allocation6 + $0x88] sm:$0xff]
        %v720 = vld [vmem:[#allocation6 + $0x90] sm:$0xff]
        %v721 = vld [vmem:[#allocation6 + $0x98] sm:$0xff]
        %v722 = vld [vmem:[#allocation6 + $0xa0] sm:$0xff]
        %v723 = vld [vmem:[#allocation6 + $0xa8] sm:$0xff]
        %v724 = vld [vmem:[#allocation6 + $0xb0] sm:$0xff]
        %v725 = vld [vmem:[#allocation6 + $0xb8] sm:$0xff]
        %v726 = vld [vmem:[#allocation6 + $0xc0] sm:$0xff]
        %v727 = vld [vmem:[#allocation6 + $0xc8] sm:$0xff]
        %v728 = vld [vmem:[#allocation6 + $0xd0] sm:$0xff]
        %v729 = vld [vmem:[#allocation6 + $0xd8] sm:$0xff]
        %v730 = vld [vmem:[#allocation6 + $0xe0] sm:$0xff]
        %v731 = vld [vmem:[#allocation6 + $0xe8] sm:$0xff]
        %v732 = vld [vmem:[#allocation6 + $0xf0] sm:$0xff]
        %v733 = vld [vmem:[#allocation6 + $0xf8] sm:$0xff]
        %v734 = vld [vmem:[#allocation6 + $0x100] sm:$0xff]
        %v735 = vld [vmem:[#allocation6 + $0x108] sm:$0xff]
        %v736 = vld [vmem:[#allocation6 + $0x110] sm:$0xff]
        %v737 = vld [vmem:[#allocation6 + $0x118] sm:$0xff]
        %v738 = vld [vmem:[#allocation6 + $0x120] sm:$0xff]
        %v739 = vld [vmem:[#allocation6 + $0x128] sm:$0xff]
        %v740 = vld [vmem:[#allocation6 + $0x130] sm:$0xff]
        %v741 = vld [vmem:[#allocation6 + $0x138] sm:$0xff]
        %v742 = vld [vmem:[#allocation6 + $0x140] sm:$0xff]
        %v743 = vld [vmem:[#allocation6 + $0x148] sm:$0xff]
        %v744 = vld [vmem:[#allocation6 + $0x150] sm:$0xff]
        %v745 = vld [vmem:[#allocation6 + $0x158] sm:$0xff]
        %v746 = vld [vmem:[#allocation6 + $0x160] sm:$0xff]
        %v747 = vld [vmem:[#allocation6 + $0x168] sm:$0xff]
        %v748 = vld [vmem:[#allocation6 + $0x170] sm:$0xff]
        %v749 = vld [vmem:[#allocation6 + $0x178] sm:$0xff]
        %v750 = vld [vmem:[#allocation6 + $0x180] sm:$0xff]
        %v751 = vld [vmem:[#allocation6 + $0x188] sm:$0xff]
        %v752 = vld [vmem:[#allocation6 + $0x190] sm:$0xff]
        %v753 = vld [vmem:[#allocation6 + $0x198] sm:$0xff]
        %v754 = vld [vmem:[#allocation6 + $0x1a0] sm:$0xff]
        %v755 = vld [vmem:[#allocation6 + $0x1a8] sm:$0xff]
        %v756 = vld [vmem:[#allocation6 + $0x1b0] sm:$0xff]
        %v757 = vld [vmem:[#allocation6 + $0x1b8] sm:$0xff]
        %v758 = vld [vmem:[#allocation6 + $0x1c0] sm:$0xff]
        %v759 = vld [vmem:[#allocation6 + $0x1c8] sm:$0xff]
        %v760 = vld [vmem:[#allocation6 + $0x1d0] sm:$0xff]
        %v761 = vld [vmem:[#allocation6 + $0x1d8] sm:$0xff]
        %v762 = vld [vmem:[#allocation6 + $0x1e0] sm:$0xff]
        %v763 = vld [vmem:[#allocation6 + $0x1e8] sm:$0xff]
        %v764 = vld [vmem:[#allocation6 + $0x1f0] sm:$0xff]
        %v765 = vld [vmem:[#allocation6 + $0x1f8] sm:$0xff]
        %v766 = vld [vmem:[%s7] sm:$0xf]
        %v768 = vlaneseq
        %v769 = vshrl.u32 %v768, 7
        %v770 = vsub.s32 0, %v769
        %v771 = vrot.slane %v766, %v770
        %v772 = vlaneseq
        %v773 = vshrl.u32 %v772, 7
        %v774 = vsub.s32 1, %v773
        %v775 = vrot.slane %v766, %v774
        %v776 = vlaneseq
        %v777 = vshrl.u32 %v776, 7
        %v778 = vsub.s32 2, %v777
        %v779 = vrot.slane %v766, %v778
        %v780 = vlaneseq
        %v781 = vshrl.u32 %v780, 7
        %v782 = vsub.s32 3, %v781
        %v783 = vrot.slane %v766, %v782
        %788 = vmatprep.subr.mxu0 %v763
        %789 = vmatpush1.msra.mxu0 %v762
        %790 = vmatprep.subr.mxu0 %v759
        %791 = vmatpush1.msra.mxu0 %v758
        %792 = vmatprep.subr.mxu0 %v755
        %793 = vmatpush1.msra.mxu0 %v754
        %794 = vmatprep.subr.mxu0 %v751
        %795 = vmatpush1.msra.mxu0 %v750
        %796 = vmatprep.subr.mxu0 %v747
        %797 = vmatpush1.msra.mxu0 %v746
        %798 = vmatprep.subr.mxu0 %v743
        %799 = vmatpush1.msra.mxu0 %v742
        %800 = vmatprep.subr.mxu0 %v739
        %801 = vmatpush1.msra.mxu0 %v738
        %802 = vmatprep.subr.mxu0 %v735
        %803 = vmatpush1.msra.mxu0 %v734
        %804 = vmatprep.subr.mxu0 %v731
        %805 = vmatpush1.msra.mxu0 %v730
        %806 = vmatprep.subr.mxu0 %v727
        %807 = vmatpush1.msra.mxu0 %v726
        %808 = vmatprep.subr.mxu0 %v723
        %809 = vmatpush1.msra.mxu0 %v722
        %810 = vmatprep.subr.mxu0 %v719
        %811 = vmatpush1.msra.mxu0 %v718
        %812 = vmatprep.subr.mxu0 %v715
        %813 = vmatpush1.msra.mxu0 %v714
        %814 = vmatprep.subr.mxu0 %v711
        %815 = vmatpush1.msra.mxu0 %v710
        %816 = vmatprep.subr.mxu0 %v707
        %817 = vmatpush1.msra.mxu0 %v706
        %818 = vmatprep.subr.mxu0 %v703
        %819 = vmatpush1.msra.mxu0 %v702
        %820 = vmatprep.subr.mxu0 0.0
        %821 = vmatpush2.msra.mxu0 0.0
        %822 = vmatprep.subr.mxu0 0.0
        %823 = vmatpush2.msra.mxu0 0.0
        %824 = vmatprep.subr.mxu0 0.0
        %825 = vmatpush2.msra.mxu0 0.0
        %826 = vmatprep.subr.mxu0 0.0
        %827 = vmatpush2.msra.mxu0 0.0
        %828 = vmatprep.subr.mxu0 0.0
        %829 = vmatpush2.msra.mxu0 0.0
        %830 = vmatprep.subr.mxu0 0.0
        %831 = vmatpush2.msra.mxu0 0.0
        %832 = vmatprep.subr.mxu0 0.0
        %833 = vmatpush2.msra.mxu0 0.0
        %834 = vmatprep.subr.mxu0 0.0
        %835 = vmatpush2.msra.mxu0 0.0
        %836 = vmatprep.subr.mxu0 0.0
        %837 = vmatpush2.msra.mxu0 0.0
        %838 = vmatprep.subr.mxu0 0.0
        %839 = vmatpush2.msra.mxu0 0.0
        %840 = vmatprep.subr.mxu0 0.0
        %841 = vmatpush2.msra.mxu0 0.0
        %842 = vmatprep.subr.mxu0 0.0
        %843 = vmatpush2.msra.mxu0 0.0
        %844 = vmatprep.subr.mxu0 0.0
        %845 = vmatpush2.msra.mxu0 0.0
        %846 = vmatprep.subr.mxu0 0.0
        %847 = vmatpush2.msra.mxu0 0.0
        %848 = vmatprep.subr.mxu0 0.0
        %849 = vmatpush2.msra.mxu0 0.0
        %850 = vmatprep.subr.mxu0 0.0
        %851 = vmatpush2.msra.mxu0 0.0
        %852 = vmatprep.mubr.f32.mxu0 0.0
        %853 = vmatmul.mubr.f32.gmra.mxu0 %v694
        %v854 = vpop.f32.mrf.mxu0
        %v855 = vadd.f32 %v771, %v854
        %v856 = vpop.f32.mrf.mxu0
        %v857 = vadd.f32 %v775, %v856
        %858 = vmatprep.mubr.f32.mxu0 0.0
        %859 = vmatmul.mubr.f32.gmra.mxu0 %v695
        %v860 = vpop.f32.mrf.mxu0
        %v861 = vadd.f32 %v771, %v860
        %v862 = vpop.f32.mrf.mxu0
        %v863 = vadd.f32 %v775, %v862
        %864 = vmatprep.mubr.f32.mxu0 0.0
        %865 = vmatmul.mubr.f32.gmra.mxu0 %v696
        %v866 = vpop.f32.mrf.mxu0
        %v867 = vadd.f32 %v771, %v866
        %v868 = vpop.f32.mrf.mxu0
        %v869 = vadd.f32 %v775, %v868
        %870 = vmatprep.mubr.f32.mxu0 0.0
        %871 = vmatmul.mubr.f32.gmra.mxu0 %v697
        %v872 = vpop.f32.mrf.mxu0
        %v873 = vadd.f32 %v771, %v872
        %v874 = vpop.f32.mrf.mxu0
        %v875 = vadd.f32 %v775, %v874
        %876 = vdwg.mxu0
        %877 = vmatprep.subr.mxu0 %v765
        %878 = vmatpush1.msra.mxu0 %v764
        %879 = vmatprep.subr.mxu0 %v761
        %880 = vmatpush1.msra.mxu0 %v760
        %881 = vmatprep.subr.mxu0 %v757
        %882 = vmatpush1.msra.mxu0 %v756
        %883 = vmatprep.subr.mxu0 %v753
        %884 = vmatpush1.msra.mxu0 %v752
        %885 = vmatprep.subr.mxu0 %v749
        %886 = vmatpush1.msra.mxu0 %v748
        %887 = vmatprep.subr.mxu0 %v745
        %888 = vmatpush1.msra.mxu0 %v744
        %889 = vmatprep.subr.mxu0 %v741
        %890 = vmatpush1.msra.mxu0 %v740
        %891 = vmatprep.subr.mxu0 %v737
        %892 = vmatpush1.msra.mxu0 %v736
        %893 = vmatprep.subr.mxu0 %v733
        %894 = vmatpush1.msra.mxu0 %v732
        %895 = vmatprep.subr.mxu0 %v729
        %896 = vmatpush1.msra.mxu0 %v728
        %897 = vmatprep.subr.mxu0 %v725
        %898 = vmatpush1.msra.mxu0 %v724
        %899 = vmatprep.subr.mxu0 %v721
        %900 = vmatpush1.msra.mxu0 %v720
        %901 = vmatprep.subr.mxu0 %v717
        %902 = vmatpush1.msra.mxu0 %v716
        %903 = vmatprep.subr.mxu0 %v713
        %904 = vmatpush1.msra.mxu0 %v712
        %905 = vmatprep.subr.mxu0 %v709
        %906 = vmatpush1.msra.mxu0 %v708
        %907 = vmatprep.subr.mxu0 %v705
        %908 = vmatpush1.msra.mxu0 %v704
        %909 = vmatprep.subr.mxu0 0.0
        %910 = vmatpush2.msra.mxu0 0.0
        %911 = vmatprep.subr.mxu0 0.0
        %912 = vmatpush2.msra.mxu0 0.0
        %913 = vmatprep.subr.mxu0 0.0
        %914 = vmatpush2.msra.mxu0 0.0
        %915 = vmatprep.subr.mxu0 0.0
        %916 = vmatpush2.msra.mxu0 0.0
        %917 = vmatprep.subr.mxu0 0.0
        %918 = vmatpush2.msra.mxu0 0.0
        %919 = vmatprep.subr.mxu0 0.0
        %920 = vmatpush2.msra.mxu0 0.0
        %921 = vmatprep.subr.mxu0 0.0
        %922 = vmatpush2.msra.mxu0 0.0
        %923 = vmatprep.subr.mxu0 0.0
        %924 = vmatpush2.msra.mxu0 0.0
        %925 = vmatprep.subr.mxu0 0.0
        %926 = vmatpush2.msra.mxu0 0.0
        %927 = vmatprep.subr.mxu0 0.0
        %928 = vmatpush2.msra.mxu0 0.0
        %929 = vmatprep.subr.mxu0 0.0
        %930 = vmatpush2.msra.mxu0 0.0
        %931 = vmatprep.subr.mxu0 0.0
        %932 = vmatpush2.msra.mxu0 0.0
        %933 = vmatprep.subr.mxu0 0.0
        %934 = vmatpush2.msra.mxu0 0.0
        %935 = vmatprep.subr.mxu0 0.0
        %936 = vmatpush2.msra.mxu0 0.0
        %937 = vmatprep.subr.mxu0 0.0
        %938 = vmatpush2.msra.mxu0 0.0
        %939 = vmatprep.subr.mxu0 0.0
        %940 = vmatpush2.msra.mxu0 0.0
        %941 = vmatprep.mubr.f32.mxu0 0.0
        %942 = vmatmul.mubr.f32.gmra.mxu0 %v694
        %v943 = vpop.f32.mrf.mxu0
        %v944 = vadd.f32 %v779, %v943
        %v945 = vpop.f32.mrf.mxu0
        %v946 = vadd.f32 %v783, %v945
        %947 = vmatprep.mubr.f32.mxu0 0.0
        %948 = vmatmul.mubr.f32.gmra.mxu0 %v695
        %v949 = vpop.f32.mrf.mxu0
        %v950 = vadd.f32 %v779, %v949
        %v951 = vpop.f32.mrf.mxu0
        %v952 = vadd.f32 %v783, %v951
        %953 = vmatprep.mubr.f32.mxu0 0.0
        %954 = vmatmul.mubr.f32.gmra.mxu0 %v696
        %v955 = vpop.f32.mrf.mxu0
        %v956 = vadd.f32 %v779, %v955
        %v957 = vpop.f32.mrf.mxu0
        %v958 = vadd.f32 %v783, %v957
        %959 = vmatprep.mubr.f32.mxu0 0.0
        %960 = vmatmul.mubr.f32.gmra.mxu0 %v697
        %v961 = vpop.f32.mrf.mxu0
        %v962 = vadd.f32 %v779, %v961
        %v963 = vpop.f32.mrf.mxu0
        %v964 = vadd.f32 %v783, %v963
        %965 = vdwg.mxu0
        %966 = vst [vmem:[#allocation4] sm:$0xff] %v855
        %967 = vst [vmem:[#allocation4 + $0x8] sm:$0xff] %v857
        %968 = vst [vmem:[#allocation4 + $0x10] sm:$0xff] %v944
        %969 = vst [vmem:[#allocation4 + $0x18] sm:$0xff] %v946
        %970 = vst [vmem:[#allocation4 + $0x20] sm:$0xff] %v861
        %971 = vst [vmem:[#allocation4 + $0x28] sm:$0xff] %v863
        %972 = vst [vmem:[#allocation4 + $0x30] sm:$0xff] %v950
        %973 = vst [vmem:[#allocation4 + $0x38] sm:$0xff] %v952
        %974 = vst [vmem:[#allocation4 + $0x40] sm:$0xff] %v867
        %975 = vst [vmem:[#allocation4 + $0x48] sm:$0xff] %v869
        %976 = vst [vmem:[#allocation4 + $0x50] sm:$0xff] %v956
        %977 = vst [vmem:[#allocation4 + $0x58] sm:$0xff] %v958
        %978 = vst [vmem:[#allocation4 + $0x60] sm:$0xff] %v873
        %979 = vst [vmem:[#allocation4 + $0x68] sm:$0xff] %v875
        %980 = vst [vmem:[#allocation4 + $0x70] sm:$0xff] %v962
        %981 = vst [vmem:[#allocation4 + $0x78] sm:$0xff] %v964
        %v982 = vld [vmem:[#allocation2] sm:$0xff]
        %v983 = vld [vmem:[#allocation3] sm:$0xff]
        %s984 = smul.u32 0, 4
        %s985 = smul.addr %s984, 8
        %s986 = scalar_lea.vmem [#allocation4], %s985
        %v987 = vld [vmem:[%s986] sm:$0xff]
        %v988 = vld [vmem:[%s986 + $0x8] sm:$0xff]
        %v989 = vld [vmem:[%s986 + $0x10] sm:$0xff]
        %v990 = vld [vmem:[%s986 + $0x18] sm:$0xff]
        %v991 = vld [vmem:[#allocation9] sm:$0xff]
        %v992 = vld [vmem:[#allocation9 + $0x8] sm:$0xff]
        %v993 = vld [vmem:[#allocation9 + $0x10] sm:$0xff]
        %v994 = vld [vmem:[#allocation9 + $0x18] sm:$0xff]
        %v995 = vld [vmem:[#allocation9 + $0x20] sm:$0xff]
        %v996 = vld [vmem:[#allocation9 + $0x28] sm:$0xff]
        %v997 = vld [vmem:[#allocation9 + $0x30] sm:$0xff]
        %v998 = vld [vmem:[#allocation9 + $0x38] sm:$0xff]
        %v999 = vld [vmem:[#allocation9 + $0x40] sm:$0xff]
        %v1000 = vld [vmem:[#allocation9 + $0x48] sm:$0xff]
        %v1001 = vld [vmem:[#allocation9 + $0x50] sm:$0xff]
        %v1002 = vld [vmem:[#allocation9 + $0x58] sm:$0xff]
        %v1003 = vld [vmem:[#allocation9 + $0x60] sm:$0xff]
        %v1004 = vld [vmem:[#allocation9 + $0x68] sm:$0xff]
        %v1005 = vld [vmem:[#allocation9 + $0x70] sm:$0xff]
        %v1006 = vld [vmem:[#allocation9 + $0x78] sm:$0xff]
        %v1007 = vld [vmem:[#allocation9 + $0x80] sm:$0xff]
        %v1008 = vld [vmem:[#allocation9 + $0x88] sm:$0xff]
        %v1009 = vld [vmem:[#allocation9 + $0x90] sm:$0xff]
        %v1010 = vld [vmem:[#allocation9 + $0x98] sm:$0xff]
        %v1011 = vld [vmem:[#allocation9 + $0xa0] sm:$0xff]
        %v1012 = vld [vmem:[#allocation9 + $0xa8] sm:$0xff]
        %v1013 = vld [vmem:[#allocation9 + $0xb0] sm:$0xff]
        %v1014 = vld [vmem:[#allocation9 + $0xb8] sm:$0xff]
        %v1015 = vld [vmem:[#allocation9 + $0xc0] sm:$0xff]
        %v1016 = vld [vmem:[#allocation9 + $0xc8] sm:$0xff]
        %v1017 = vld [vmem:[#allocation9 + $0xd0] sm:$0xff]
        %v1018 = vld [vmem:[#allocation9 + $0xd8] sm:$0xff]
        %v1019 = vld [vmem:[#allocation9 + $0xe0] sm:$0xff]
        %v1020 = vld [vmem:[#allocation9 + $0xe8] sm:$0xff]
        %v1021 = vld [vmem:[#allocation9 + $0xf0] sm:$0xff]
        %v1022 = vld [vmem:[#allocation9 + $0xf8] sm:$0xff]
        %v1023 = vld [vmem:[#allocation9 + $0x100] sm:$0xff]
        %v1024 = vld [vmem:[#allocation9 + $0x108] sm:$0xff]
        %v1025 = vld [vmem:[#allocation9 + $0x110] sm:$0xff]
        %v1026 = vld [vmem:[#allocation9 + $0x118] sm:$0xff]
        %v1027 = vld [vmem:[#allocation9 + $0x120] sm:$0xff]
        %v1028 = vld [vmem:[#allocation9 + $0x128] sm:$0xff]
        %v1029 = vld [vmem:[#allocation9 + $0x130] sm:$0xff]
        %v1030 = vld [vmem:[#allocation9 + $0x138] sm:$0xff]
        %v1031 = vld [vmem:[#allocation9 + $0x140] sm:$0xff]
        %v1032 = vld [vmem:[#allocation9 + $0x148] sm:$0xff]
        %v1033 = vld [vmem:[#allocation9 + $0x150] sm:$0xff]
        %v1034 = vld [vmem:[#allocation9 + $0x158] sm:$0xff]
        %v1035 = vld [vmem:[#allocation9 + $0x160] sm:$0xff]
        %v1036 = vld [vmem:[#allocation9 + $0x168] sm:$0xff]
        %v1037 = vld [vmem:[#allocation9 + $0x170] sm:$0xff]
        %v1038 = vld [vmem:[#allocation9 + $0x178] sm:$0xff]
        %v1039 = vld [vmem:[#allocation9 + $0x180] sm:$0xff]
        %v1040 = vld [vmem:[#allocation9 + $0x188] sm:$0xff]
        %v1041 = vld [vmem:[#allocation9 + $0x190] sm:$0xff]
        %v1042 = vld [vmem:[#allocation9 + $0x198] sm:$0xff]
        %v1043 = vld [vmem:[#allocation9 + $0x1a0] sm:$0xff]
        %v1044 = vld [vmem:[#allocation9 + $0x1a8] sm:$0xff]
        %v1045 = vld [vmem:[#allocation9 + $0x1b0] sm:$0xff]
        %v1046 = vld [vmem:[#allocation9 + $0x1b8] sm:$0xff]
        %v1047 = vld [vmem:[#allocation9 + $0x1c0] sm:$0xff]
        %v1048 = vld [vmem:[#allocation9 + $0x1c8] sm:$0xff]
        %v1049 = vld [vmem:[#allocation9 + $0x1d0] sm:$0xff]
        %v1050 = vld [vmem:[#allocation9 + $0x1d8] sm:$0xff]
        %v1051 = vld [vmem:[#allocation9 + $0x1e0] sm:$0xff]
        %v1052 = vld [vmem:[#allocation9 + $0x1e8] sm:$0xff]
        %v1053 = vld [vmem:[#allocation9 + $0x1f0] sm:$0xff]
        %v1054 = vld [vmem:[#allocation9 + $0x1f8] sm:$0xff]
        %1055 = vmatprep.subr.mxu0 %v1052
        %1056 = vmatpush1.msra.mxu0 %v1051
        %1057 = vmatprep.subr.mxu0 %v1048
        %1058 = vmatpush1.msra.mxu0 %v1047
        %1059 = vmatprep.subr.mxu0 %v1044
        %1060 = vmatpush1.msra.mxu0 %v1043
        %1061 = vmatprep.subr.mxu0 %v1040
        %1062 = vmatpush1.msra.mxu0 %v1039
        %1063 = vmatprep.subr.mxu0 %v1036
        %1064 = vmatpush1.msra.mxu0 %v1035
        %1065 = vmatprep.subr.mxu0 %v1032
        %1066 = vmatpush1.msra.mxu0 %v1031
        %1067 = vmatprep.subr.mxu0 %v1028
        %1068 = vmatpush1.msra.mxu0 %v1027
        %1069 = vmatprep.subr.mxu0 %v1024
        %1070 = vmatpush1.msra.mxu0 %v1023
        %1071 = vmatprep.subr.mxu0 %v1020
        %1072 = vmatpush1.msra.mxu0 %v1019
        %1073 = vmatprep.subr.mxu0 %v1016
        %1074 = vmatpush1.msra.mxu0 %v1015
        %1075 = vmatprep.subr.mxu0 %v1012
        %1076 = vmatpush1.msra.mxu0 %v1011
        %1077 = vmatprep.subr.mxu0 %v1008
        %1078 = vmatpush1.msra.mxu0 %v1007
        %1079 = vmatprep.subr.mxu0 %v1004
        %1080 = vmatpush1.msra.mxu0 %v1003
        %1081 = vmatprep.subr.mxu0 %v1000
        %1082 = vmatpush1.msra.mxu0 %v999
        %1083 = vmatprep.subr.mxu0 %v996
        %1084 = vmatpush1.msra.mxu0 %v995
        %1085 = vmatprep.subr.mxu0 %v992
        %1086 = vmatpush1.msra.mxu0 %v991
        %1087 = vmatprep.subr.mxu0 0.0
        %1088 = vmatpush2.msra.mxu0 0.0
        %1089 = vmatprep.subr.mxu0 0.0
        %1090 = vmatpush2.msra.mxu0 0.0
        %1091 = vmatprep.subr.mxu0 0.0
        %1092 = vmatpush2.msra.mxu0 0.0
        %1093 = vmatprep.subr.mxu0 0.0
        %1094 = vmatpush2.msra.mxu0 0.0
        %1095 = vmatprep.subr.mxu0 0.0
        %1096 = vmatpush2.msra.mxu0 0.0
        %1097 = vmatprep.subr.mxu0 0.0
        %1098 = vmatpush2.msra.mxu0 0.0
        %1099 = vmatprep.subr.mxu0 0.0
        %1100 = vmatpush2.msra.mxu0 0.0
        %1101 = vmatprep.subr.mxu0 0.0
        %1102 = vmatpush2.msra.mxu0 0.0
        %1103 = vmatprep.subr.mxu0 0.0
        %1104 = vmatpush2.msra.mxu0 0.0
        %1105 = vmatprep.subr.mxu0 0.0
        %1106 = vmatpush2.msra.mxu0 0.0
        %1107 = vmatprep.subr.mxu0 0.0
        %1108 = vmatpush2.msra.mxu0 0.0
        %1109 = vmatprep.subr.mxu0 0.0
        %1110 = vmatpush2.msra.mxu0 0.0
        %1111 = vmatprep.subr.mxu0 0.0
        %1112 = vmatpush2.msra.mxu0 0.0
        %1113 = vmatprep.subr.mxu0 0.0
        %1114 = vmatpush2.msra.mxu0 0.0
        %1115 = vmatprep.subr.mxu0 0.0
        %1116 = vmatpush2.msra.mxu0 0.0
        %1117 = vmatprep.subr.mxu0 0.0
        %1118 = vmatpush2.msra.mxu0 0.0
        %1119 = vmatprep.mubr.f32.mxu0 0.0
        %1120 = vmatmul.mubr.f32.gmra.mxu0 %v982
        %v1121 = vpop.f32.mrf.mxu0
        %v1122 = vadd.f32 0.0, %v1121
        %v1123 = vpop.f32.mrf.mxu0
        %v1124 = vadd.f32 0.0, %v1123
        %1125 = vdwg.mxu0
        %1126 = vmatprep.subr.mxu0 %v1054
        %1127 = vmatpush1.msra.mxu0 %v1053
        %1128 = vmatprep.subr.mxu0 %v1050
        %1129 = vmatpush1.msra.mxu0 %v1049
        %1130 = vmatprep.subr.mxu0 %v1046
        %1131 = vmatpush1.msra.mxu0 %v1045
        %1132 = vmatprep.subr.mxu0 %v1042
        %1133 = vmatpush1.msra.mxu0 %v1041
        %1134 = vmatprep.subr.mxu0 %v1038
        %1135 = vmatpush1.msra.mxu0 %v1037
        %1136 = vmatprep.subr.mxu0 %v1034
        %1137 = vmatpush1.msra.mxu0 %v1033
        %1138 = vmatprep.subr.mxu0 %v1030
        %1139 = vmatpush1.msra.mxu0 %v1029
        %1140 = vmatprep.subr.mxu0 %v1026
        %1141 = vmatpush1.msra.mxu0 %v1025
        %1142 = vmatprep.subr.mxu0 %v1022
        %1143 = vmatpush1.msra.mxu0 %v1021
        %1144 = vmatprep.subr.mxu0 %v1018
        %1145 = vmatpush1.msra.mxu0 %v1017
        %1146 = vmatprep.subr.mxu0 %v1014
        %1147 = vmatpush1.msra.mxu0 %v1013
        %1148 = vmatprep.subr.mxu0 %v1010
        %1149 = vmatpush1.msra.mxu0 %v1009
        %1150 = vmatprep.subr.mxu0 %v1006
        %1151 = vmatpush1.msra.mxu0 %v1005
        %1152 = vmatprep.subr.mxu0 %v1002
        %1153 = vmatpush1.msra.mxu0 %v1001
        %1154 = vmatprep.subr.mxu0 %v998
        %1155 = vmatpush1.msra.mxu0 %v997
        %1156 = vmatprep.subr.mxu0 %v994
        %1157 = vmatpush1.msra.mxu0 %v993
        %1158 = vmatprep.subr.mxu0 0.0
        %1159 = vmatpush2.msra.mxu0 0.0
        %1160 = vmatprep.subr.mxu0 0.0
        %1161 = vmatpush2.msra.mxu0 0.0
        %1162 = vmatprep.subr.mxu0 0.0
        %1163 = vmatpush2.msra.mxu0 0.0
        %1164 = vmatprep.subr.mxu0 0.0
        %1165 = vmatpush2.msra.mxu0 0.0
        %1166 = vmatprep.subr.mxu0 0.0
        %1167 = vmatpush2.msra.mxu0 0.0
        %1168 = vmatprep.subr.mxu0 0.0
        %1169 = vmatpush2.msra.mxu0 0.0
        %1170 = vmatprep.subr.mxu0 0.0
        %1171 = vmatpush2.msra.mxu0 0.0
        %1172 = vmatprep.subr.mxu0 0.0
        %1173 = vmatpush2.msra.mxu0 0.0
        %1174 = vmatprep.subr.mxu0 0.0
        %1175 = vmatpush2.msra.mxu0 0.0
        %1176 = vmatprep.subr.mxu0 0.0
        %1177 = vmatpush2.msra.mxu0 0.0
        %1178 = vmatprep.subr.mxu0 0.0
        %1179 = vmatpush2.msra.mxu0 0.0
        %1180 = vmatprep.subr.mxu0 0.0
        %1181 = vmatpush2.msra.mxu0 0.0
        %1182 = vmatprep.subr.mxu0 0.0
        %1183 = vmatpush2.msra.mxu0 0.0
        %1184 = vmatprep.subr.mxu0 0.0
        %1185 = vmatpush2.msra.mxu0 0.0
        %1186 = vmatprep.subr.mxu0 0.0
        %1187 = vmatpush2.msra.mxu0 0.0
        %1188 = vmatprep.subr.mxu0 0.0
        %1189 = vmatpush2.msra.mxu0 0.0
        %1190 = vmatprep.mubr.f32.mxu0 0.0
        %1191 = vmatmul.mubr.f32.gmra.mxu0 %v982
        %v1192 = vpop.f32.mrf.mxu0
        %v1193 = vadd.f32 0.0, %v1192
        %v1194 = vpop.f32.mrf.mxu0
        %v1195 = vadd.f32 0.0, %v1194
        %1196 = vdwg.mxu0
        %v1197 = vadd.f32 %v987, %v1122
        %v1198 = vadd.f32 %v988, %v1124
        %v1199 = vadd.f32 %v989, %v1193
        %v1200 = vadd.f32 %v990, %v1195
        %v1201 = vxor.u32 %v1197, 2147483648
        %v1202 = vxor.u32 %v1198, 2147483648
        %v1203 = vmul.f32 %v1201, 1.442695
        %v1204 = vpow.pop %v1203
        %v1205 = vmul.f32 %v1202, 1.442695
        %v1206 = vpow.pop %v1205
        %v1207 = vadd.f32 %v1204, 1.0
        %v1208 = vadd.f32 %v1206, 1.0
        %v1209 = vrcp.pop %v1207
        %v1210 = vmul.f32 1.0, %v1209
        %v1211 = vrcp.pop %v1208
        %v1212 = vmul.f32 1.0, %v1211
        %v1213 = vtanh.pop %v1199
        %v1214 = vxor.u32 %v1200, 2147483648
        %v1215 = vmul.f32 %v1214, 1.442695
        %v1216 = vpow.pop %v1215
        %v1217 = vadd.f32 %v1216, 1.0
        %v1218 = vrcp.pop %v1217
        %v1219 = vmul.f32 1.0, %v1218
        %v1220 = vmul.f32 %v1212, %v983
        %v1221 = vmul.f32 %v1210, %v1213
        %v1222 = vadd.f32 %v1220, %v1221
        %v1223 = vtanh.pop %v1222
        %v1224 = vmul.f32 %v1219, %v1223
        %1225 = vst [vmem:[#allocation5] sm:$0xff] %v1224
        %s1226 = smul.u32 1, 4
        %s1227 = smul.addr %s1226, 8
        %s1228 = scalar_lea.vmem [#allocation4], %s1227
        %v1229 = vld [vmem:[%s1228] sm:$0xff]
        %v1230 = vld [vmem:[%s1228 + $0x8] sm:$0xff]
        %v1231 = vld [vmem:[%s1228 + $0x10] sm:$0xff]
        %v1232 = vld [vmem:[%s1228 + $0x18] sm:$0xff]
        %v1233 = vld [vmem:[#allocation9] sm:$0xff]
        %v1234 = vld [vmem:[#allocation9 + $0x8] sm:$0xff]
        %v1235 = vld [vmem:[#allocation9 + $0x10] sm:$0xff]
        %v1236 = vld [vmem:[#allocation9 + $0x18] sm:$0xff]
        %v1237 = vld [vmem:[#allocation9 + $0x20] sm:$0xff]
        %v1238 = vld [vmem:[#allocation9 + $0x28] sm:$0xff]
        %v1239 = vld [vmem:[#allocation9 + $0x30] sm:$0xff]
        %v1240 = vld [vmem:[#allocation9 + $0x38] sm:$0xff]
        %v1241 = vld [vmem:[#allocation9 + $0x40] sm:$0xff]
        %v1242 = vld [vmem:[#allocation9 + $0x48] sm:$0xff]
        %v1243 = vld [vmem:[#allocation9 + $0x50] sm:$0xff]
        %v1244 = vld [vmem:[#allocation9 + $0x58] sm:$0xff]
        %v1245 = vld [vmem:[#allocation9 + $0x60] sm:$0xff]
        %v1246 = vld [vmem:[#allocation9 + $0x68] sm:$0xff]
        %v1247 = vld [vmem:[#allocation9 + $0x70] sm:$0xff]
        %v1248 = vld [vmem:[#allocation9 + $0x78] sm:$0xff]
        %v1249 = vld [vmem:[#allocation9 + $0x80] sm:$0xff]
        %v1250 = vld [vmem:[#allocation9 + $0x88] sm:$0xff]
        %v1251 = vld [vmem:[#allocation9 + $0x90] sm:$0xff]
        %v1252 = vld [vmem:[#allocation9 + $0x98] sm:$0xff]
        %v1253 = vld [vmem:[#allocation9 + $0xa0] sm:$0xff]
        %v1254 = vld [vmem:[#allocation9 + $0xa8] sm:$0xff]
        %v1255 = vld [vmem:[#allocation9 + $0xb0] sm:$0xff]
        %v1256 = vld [vmem:[#allocation9 + $0xb8] sm:$0xff]
        %v1257 = vld [vmem:[#allocation9 + $0xc0] sm:$0xff]
        %v1258 = vld [vmem:[#allocation9 + $0xc8] sm:$0xff]
        %v1259 = vld [vmem:[#allocation9 + $0xd0] sm:$0xff]
        %v1260 = vld [vmem:[#allocation9 + $0xd8] sm:$0xff]
        %v1261 = vld [vmem:[#allocation9 + $0xe0] sm:$0xff]
        %v1262 = vld [vmem:[#allocation9 + $0xe8] sm:$0xff]
        %v1263 = vld [vmem:[#allocation9 + $0xf0] sm:$0xff]
        %v1264 = vld [vmem:[#allocation9 + $0xf8] sm:$0xff]
        %v1265 = vld [vmem:[#allocation9 + $0x100] sm:$0xff]
        %v1266 = vld [vmem:[#allocation9 + $0x108] sm:$0xff]
        %v1267 = vld [vmem:[#allocation9 + $0x110] sm:$0xff]
        %v1268 = vld [vmem:[#allocation9 + $0x118] sm:$0xff]
        %v1269 = vld [vmem:[#allocation9 + $0x120] sm:$0xff]
        %v1270 = vld [vmem:[#allocation9 + $0x128] sm:$0xff]
        %v1271 = vld [vmem:[#allocation9 + $0x130] sm:$0xff]
        %v1272 = vld [vmem:[#allocation9 + $0x138] sm:$0xff]
        %v1273 = vld [vmem:[#allocation9 + $0x140] sm:$0xff]
        %v1274 = vld [vmem:[#allocation9 + $0x148] sm:$0xff]
        %v1275 = vld [vmem:[#allocation9 + $0x150] sm:$0xff]
        %v1276 = vld [vmem:[#allocation9 + $0x158] sm:$0xff]
        %v1277 = vld [vmem:[#allocation9 + $0x160] sm:$0xff]
        %v1278 = vld [vmem:[#allocation9 + $0x168] sm:$0xff]
        %v1279 = vld [vmem:[#allocation9 + $0x170] sm:$0xff]
        %v1280 = vld [vmem:[#allocation9 + $0x178] sm:$0xff]
        %v1281 = vld [vmem:[#allocation9 + $0x180] sm:$0xff]
        %v1282 = vld [vmem:[#allocation9 + $0x188] sm:$0xff]
        %v1283 = vld [vmem:[#allocation9 + $0x190] sm:$0xff]
        %v1284 = vld [vmem:[#allocation9 + $0x198] sm:$0xff]
        %v1285 = vld [vmem:[#allocation9 + $0x1a0] sm:$0xff]
        %v1286 = vld [vmem:[#allocation9 + $0x1a8] sm:$0xff]
        %v1287 = vld [vmem:[#allocation9 + $0x1b0] sm:$0xff]
        %v1288 = vld [vmem:[#allocation9 + $0x1b8] sm:$0xff]
        %v1289 = vld [vmem:[#allocation9 + $0x1c0] sm:$0xff]
        %v1290 = vld [vmem:[#allocation9 + $0x1c8] sm:$0xff]
        %v1291 = vld [vmem:[#allocation9 + $0x1d0] sm:$0xff]
        %v1292 = vld [vmem:[#allocation9 + $0x1d8] sm:$0xff]
        %v1293 = vld [vmem:[#allocation9 + $0x1e0] sm:$0xff]
        %v1294 = vld [vmem:[#allocation9 + $0x1e8] sm:$0xff]
        %v1295 = vld [vmem:[#allocation9 + $0x1f0] sm:$0xff]
        %v1296 = vld [vmem:[#allocation9 + $0x1f8] sm:$0xff]
        %1297 = vmatprep.subr.mxu0 %v1294
        %1298 = vmatpush1.msra.mxu0 %v1293
        %1299 = vmatprep.subr.mxu0 %v1290
        %1300 = vmatpush1.msra.mxu0 %v1289
        %1301 = vmatprep.subr.mxu0 %v1286
        %1302 = vmatpush1.msra.mxu0 %v1285
        %1303 = vmatprep.subr.mxu0 %v1282
        %1304 = vmatpush1.msra.mxu0 %v1281
        %1305 = vmatprep.subr.mxu0 %v1278
        %1306 = vmatpush1.msra.mxu0 %v1277
        %1307 = vmatprep.subr.mxu0 %v1274
        %1308 = vmatpush1.msra.mxu0 %v1273
        %1309 = vmatprep.subr.mxu0 %v1270
        %1310 = vmatpush1.msra.mxu0 %v1269
        %1311 = vmatprep.subr.mxu0 %v1266
        %1312 = vmatpush1.msra.mxu0 %v1265
        %1313 = vmatprep.subr.mxu0 %v1262
        %1314 = vmatpush1.msra.mxu0 %v1261
        %1315 = vmatprep.subr.mxu0 %v1258
        %1316 = vmatpush1.msra.mxu0 %v1257
        %1317 = vmatprep.subr.mxu0 %v1254
        %1318 = vmatpush1.msra.mxu0 %v1253
        %1319 = vmatprep.subr.mxu0 %v1250
        %1320 = vmatpush1.msra.mxu0 %v1249
        %1321 = vmatprep.subr.mxu0 %v1246
        %1322 = vmatpush1.msra.mxu0 %v1245
        %1323 = vmatprep.subr.mxu0 %v1242
        %1324 = vmatpush1.msra.mxu0 %v1241
        %1325 = vmatprep.subr.mxu0 %v1238
        %1326 = vmatpush1.msra.mxu0 %v1237
        %1327 = vmatprep.subr.mxu0 %v1234
        %1328 = vmatpush1.msra.mxu0 %v1233
        %1329 = vmatprep.subr.mxu0 0.0
        %1330 = vmatpush2.msra.mxu0 0.0
        %1331 = vmatprep.subr.mxu0 0.0
        %1332 = vmatpush2.msra.mxu0 0.0
        %1333 = vmatprep.subr.mxu0 0.0
        %1334 = vmatpush2.msra.mxu0 0.0
        %1335 = vmatprep.subr.mxu0 0.0
        %1336 = vmatpush2.msra.mxu0 0.0
        %1337 = vmatprep.subr.mxu0 0.0
        %1338 = vmatpush2.msra.mxu0 0.0
        %1339 = vmatprep.subr.mxu0 0.0
        %1340 = vmatpush2.msra.mxu0 0.0
        %1341 = vmatprep.subr.mxu0 0.0
        %1342 = vmatpush2.msra.mxu0 0.0
        %1343 = vmatprep.subr.mxu0 0.0
        %1344 = vmatpush2.msra.mxu0 0.0
        %1345 = vmatprep.subr.mxu0 0.0
        %1346 = vmatpush2.msra.mxu0 0.0
        %1347 = vmatprep.subr.mxu0 0.0
        %1348 = vmatpush2.msra.mxu0 0.0
        %1349 = vmatprep.subr.mxu0 0.0
        %1350 = vmatpush2.msra.mxu0 0.0
        %1351 = vmatprep.subr.mxu0 0.0
        %1352 = vmatpush2.msra.mxu0 0.0
        %1353 = vmatprep.subr.mxu0 0.0
        %1354 = vmatpush2.msra.mxu0 0.0
        %1355 = vmatprep.subr.mxu0 0.0
        %1356 = vmatpush2.msra.mxu0 0.0
        %1357 = vmatprep.subr.mxu0 0.0
        %1358 = vmatpush2.msra.mxu0 0.0
        %1359 = vmatprep.subr.mxu0 0.0
        %1360 = vmatpush2.msra.mxu0 0.0
        %1361 = vmatprep.mubr.f32.mxu0 0.0
        %1362 = vmatmul.mubr.f32.gmra.mxu0 %v1224
        %v1363 = vpop.f32.mrf.mxu0
        %v1364 = vadd.f32 0.0, %v1363
        %v1365 = vpop.f32.mrf.mxu0
        %v1366 = vadd.f32 0.0, %v1365
        %1367 = vdwg.mxu0
        %1368 = vmatprep.subr.mxu0 %v1296
        %1369 = vmatpush1.msra.mxu0 %v1295
        %1370 = vmatprep.subr.mxu0 %v1292
        %1371 = vmatpush1.msra.mxu0 %v1291
        %1372 = vmatprep.subr.mxu0 %v1288
        %1373 = vmatpush1.msra.mxu0 %v1287
        %1374 = vmatprep.subr.mxu0 %v1284
        %1375 = vmatpush1.msra.mxu0 %v1283
        %1376 = vmatprep.subr.mxu0 %v1280
        %1377 = vmatpush1.msra.mxu0 %v1279
        %1378 = vmatprep.subr.mxu0 %v1276
        %1379 = vmatpush1.msra.mxu0 %v1275
        %1380 = vmatprep.subr.mxu0 %v1272
        %1381 = vmatpush1.msra.mxu0 %v1271
        %1382 = vmatprep.subr.mxu0 %v1268
        %1383 = vmatpush1.msra.mxu0 %v1267
        %1384 = vmatprep.subr.mxu0 %v1264
        %1385 = vmatpush1.msra.mxu0 %v1263
        %1386 = vmatprep.subr.mxu0 %v1260
        %1387 = vmatpush1.msra.mxu0 %v1259
        %1388 = vmatprep.subr.mxu0 %v1256
        %1389 = vmatpush1.msra.mxu0 %v1255
        %1390 = vmatprep.subr.mxu0 %v1252
        %1391 = vmatpush1.msra.mxu0 %v1251
        %1392 = vmatprep.subr.mxu0 %v1248
        %1393 = vmatpush1.msra.mxu0 %v1247
        %1394 = vmatprep.subr.mxu0 %v1244
        %1395 = vmatpush1.msra.mxu0 %v1243
        %1396 = vmatprep.subr.mxu0 %v1240
        %1397 = vmatpush1.msra.mxu0 %v1239
        %1398 = vmatprep.subr.mxu0 %v1236
        %1399 = vmatpush1.msra.mxu0 %v1235
        %1400 = vmatprep.subr.mxu0 0.0
        %1401 = vmatpush2.msra.mxu0 0.0
        %1402 = vmatprep.subr.mxu0 0.0
        %1403 = vmatpush2.msra.mxu0 0.0
        %1404 = vmatprep.subr.mxu0 0.0
        %1405 = vmatpush2.msra.mxu0 0.0
        %1406 = vmatprep.subr.mxu0 0.0
        %1407 = vmatpush2.msra.mxu0 0.0
        %1408 = vmatprep.subr.mxu0 0.0
        %1409 = vmatpush2.msra.mxu0 0.0
        %1410 = vmatprep.subr.mxu0 0.0
        %1411 = vmatpush2.msra.mxu0 0.0
        %1412 = vmatprep.subr.mxu0 0.0
        %1413 = vmatpush2.msra.mxu0 0.0
        %1414 = vmatprep.subr.mxu0 0.0
        %1415 = vmatpush2.msra.mxu0 0.0
        %1416 = vmatprep.subr.mxu0 0.0
        %1417 = vmatpush2.msra.mxu0 0.0
        %1418 = vmatprep.subr.mxu0 0.0
        %1419 = vmatpush2.msra.mxu0 0.0
        %1420 = vmatprep.subr.mxu0 0.0
        %1421 = vmatpush2.msra.mxu0 0.0
        %1422 = vmatprep.subr.mxu0 0.0
        %1423 = vmatpush2.msra.mxu0 0.0
        %1424 = vmatprep.subr.mxu0 0.0
        %1425 = vmatpush2.msra.mxu0 0.0
        %1426 = vmatprep.subr.mxu0 0.0
        %1427 = vmatpush2.msra.mxu0 0.0
        %1428 = vmatprep.subr.mxu0 0.0
        %1429 = vmatpush2.msra.mxu0 0.0
        %1430 = vmatprep.subr.mxu0 0.0
        %1431 = vmatpush2.msra.mxu0 0.0
        %1432 = vmatprep.mubr.f32.mxu0 0.0
        %1433 = vmatmul.mubr.f32.gmra.mxu0 %v1224
        %v1434 = vpop.f32.mrf.mxu0
        %v1435 = vadd.f32 0.0, %v1434
        %v1436 = vpop.f32.mrf.mxu0
        %v1437 = vadd.f32 0.0, %v1436
        %1438 = vdwg.mxu0
        %v1439 = vadd.f32 %v1229, %v1364
        %v1440 = vadd.f32 %v1230, %v1366
        %v1441 = vadd.f32 %v1231, %v1435
        %v1442 = vadd.f32 %v1232, %v1437
        %v1443 = vxor.u32 %v1439, 2147483648
        %v1444 = vxor.u32 %v1440, 2147483648
        %v1445 = vmul.f32 %v1443, 1.442695
        %v1446 = vpow.pop %v1445
        %v1447 = vmul.f32 %v1444, 1.442695
        %v1448 = vpow.pop %v1447
        %v1449 = vadd.f32 %v1446, 1.0
        %v1450 = vadd.f32 %v1448, 1.0
        %v1451 = vrcp.pop %v1449
        %v1452 = vmul.f32 1.0, %v1451
        %v1453 = vrcp.pop %v1450
        %v1454 = vmul.f32 1.0, %v1453
        %v1455 = vtanh.pop %v1441
        %v1456 = vxor.u32 %v1442, 2147483648
        %v1457 = vmul.f32 %v1456, 1.442695
        %v1458 = vpow.pop %v1457
        %v1459 = vadd.f32 %v1458, 1.0
        %v1460 = vrcp.pop %v1459
        %v1461 = vmul.f32 1.0, %v1460
        %v1462 = vmul.f32 %v1454, %v1222
        %v1463 = vmul.f32 %v1452, %v1455
        %v1464 = vadd.f32 %v1462, %v1463
        %v1465 = vtanh.pop %v1464
        %v1466 = vmul.f32 %v1461, %v1465
        %s1467 = scalar_lea.vmem [#allocation5], 8
        %1468 = vst [vmem:[%s1467] sm:$0xff] %v1466
        %s1469 = smul.u32 2, 4
        %s1470 = smul.addr %s1469, 8
        %s1471 = scalar_lea.vmem [#allocation4], %s1470
        %v1472 = vld [vmem:[%s1471] sm:$0xff]
        %v1473 = vld [vmem:[%s1471 + $0x8] sm:$0xff]
        %v1474 = vld [vmem:[%s1471 + $0x10] sm:$0xff]
        %v1475 = vld [vmem:[%s1471 + $0x18] sm:$0xff]
        %v1476 = vld [vmem:[#allocation9] sm:$0xff]
        %v1477 = vld [vmem:[#allocation9 + $0x8] sm:$0xff]
        %v1478 = vld [vmem:[#allocation9 + $0x10] sm:$0xff]
        %v1479 = vld [vmem:[#allocation9 + $0x18] sm:$0xff]
        %v1480 = vld [vmem:[#allocation9 + $0x20] sm:$0xff]
        %v1481 = vld [vmem:[#allocation9 + $0x28] sm:$0xff]
        %v1482 = vld [vmem:[#allocation9 + $0x30] sm:$0xff]
        %v1483 = vld [vmem:[#allocation9 + $0x38] sm:$0xff]
        %v1484 = vld [vmem:[#allocation9 + $0x40] sm:$0xff]
        %v1485 = vld [vmem:[#allocation9 + $0x48] sm:$0xff]
        %v1486 = vld [vmem:[#allocation9 + $0x50] sm:$0xff]
        %v1487 = vld [vmem:[#allocation9 + $0x58] sm:$0xff]
        %v1488 = vld [vmem:[#allocation9 + $0x60] sm:$0xff]
        %v1489 = vld [vmem:[#allocation9 + $0x68] sm:$0xff]
        %v1490 = vld [vmem:[#allocation9 + $0x70] sm:$0xff]
        %v1491 = vld [vmem:[#allocation9 + $0x78] sm:$0xff]
        %v1492 = vld [vmem:[#allocation9 + $0x80] sm:$0xff]
        %v1493 = vld [vmem:[#allocation9 + $0x88] sm:$0xff]
        %v1494 = vld [vmem:[#allocation9 + $0x90] sm:$0xff]
        %v1495 = vld [vmem:[#allocation9 + $0x98] sm:$0xff]
        %v1496 = vld [vmem:[#allocation9 + $0xa0] sm:$0xff]
        %v1497 = vld [vmem:[#allocation9 + $0xa8] sm:$0xff]
        %v1498 = vld [vmem:[#allocation9 + $0xb0] sm:$0xff]
        %v1499 = vld [vmem:[#allocation9 + $0xb8] sm:$0xff]
        %v1500 = vld [vmem:[#allocation9 + $0xc0] sm:$0xff]
        %v1501 = vld [vmem:[#allocation9 + $0xc8] sm:$0xff]
        %v1502 = vld [vmem:[#allocation9 + $0xd0] sm:$0xff]
        %v1503 = vld [vmem:[#allocation9 + $0xd8] sm:$0xff]
        %v1504 = vld [vmem:[#allocation9 + $0xe0] sm:$0xff]
        %v1505 = vld [vmem:[#allocation9 + $0xe8] sm:$0xff]
        %v1506 = vld [vmem:[#allocation9 + $0xf0] sm:$0xff]
        %v1507 = vld [vmem:[#allocation9 + $0xf8] sm:$0xff]
        %v1508 = vld [vmem:[#allocation9 + $0x100] sm:$0xff]
        %v1509 = vld [vmem:[#allocation9 + $0x108] sm:$0xff]
        %v1510 = vld [vmem:[#allocation9 + $0x110] sm:$0xff]
        %v1511 = vld [vmem:[#allocation9 + $0x118] sm:$0xff]
        %v1512 = vld [vmem:[#allocation9 + $0x120] sm:$0xff]
        %v1513 = vld [vmem:[#allocation9 + $0x128] sm:$0xff]
        %v1514 = vld [vmem:[#allocation9 + $0x130] sm:$0xff]
        %v1515 = vld [vmem:[#allocation9 + $0x138] sm:$0xff]
        %v1516 = vld [vmem:[#allocation9 + $0x140] sm:$0xff]
        %v1517 = vld [vmem:[#allocation9 + $0x148] sm:$0xff]
        %v1518 = vld [vmem:[#allocation9 + $0x150] sm:$0xff]
        %v1519 = vld [vmem:[#allocation9 + $0x158] sm:$0xff]
        %v1520 = vld [vmem:[#allocation9 + $0x160] sm:$0xff]
        %v1521 = vld [vmem:[#allocation9 + $0x168] sm:$0xff]
        %v1522 = vld [vmem:[#allocation9 + $0x170] sm:$0xff]
        %v1523 = vld [vmem:[#allocation9 + $0x178] sm:$0xff]
        %v1524 = vld [vmem:[#allocation9 + $0x180] sm:$0xff]
        %v1525 = vld [vmem:[#allocation9 + $0x188] sm:$0xff]
        %v1526 = vld [vmem:[#allocation9 + $0x190] sm:$0xff]
        %v1527 = vld [vmem:[#allocation9 + $0x198] sm:$0xff]
        %v1528 = vld [vmem:[#allocation9 + $0x1a0] sm:$0xff]
        %v1529 = vld [vmem:[#allocation9 + $0x1a8] sm:$0xff]
        %v1530 = vld [vmem:[#allocation9 + $0x1b0] sm:$0xff]
        %v1531 = vld [vmem:[#allocation9 + $0x1b8] sm:$0xff]
        %v1532 = vld [vmem:[#allocation9 + $0x1c0] sm:$0xff]
        %v1533 = vld [vmem:[#allocation9 + $0x1c8] sm:$0xff]
        %v1534 = vld [vmem:[#allocation9 + $0x1d0] sm:$0xff]
        %v1535 = vld [vmem:[#allocation9 + $0x1d8] sm:$0xff]
        %v1536 = vld [vmem:[#allocation9 + $0x1e0] sm:$0xff]
        %v1537 = vld [vmem:[#allocation9 + $0x1e8] sm:$0xff]
        %v1538 = vld [vmem:[#allocation9 + $0x1f0] sm:$0xff]
        %v1539 = vld [vmem:[#allocation9 + $0x1f8] sm:$0xff]
        %1540 = vmatprep.subr.mxu0 %v1537
        %1541 = vmatpush1.msra.mxu0 %v1536
        %1542 = vmatprep.subr.mxu0 %v1533
        %1543 = vmatpush1.msra.mxu0 %v1532
        %1544 = vmatprep.subr.mxu0 %v1529
        %1545 = vmatpush1.msra.mxu0 %v1528
        %1546 = vmatprep.subr.mxu0 %v1525
        %1547 = vmatpush1.msra.mxu0 %v1524
        %1548 = vmatprep.subr.mxu0 %v1521
        %1549 = vmatpush1.msra.mxu0 %v1520
        %1550 = vmatprep.subr.mxu0 %v1517
        %1551 = vmatpush1.msra.mxu0 %v1516
        %1552 = vmatprep.subr.mxu0 %v1513
        %1553 = vmatpush1.msra.mxu0 %v1512
        %1554 = vmatprep.subr.mxu0 %v1509
        %1555 = vmatpush1.msra.mxu0 %v1508
        %1556 = vmatprep.subr.mxu0 %v1505
        %1557 = vmatpush1.msra.mxu0 %v1504
        %1558 = vmatprep.subr.mxu0 %v1501
        %1559 = vmatpush1.msra.mxu0 %v1500
        %1560 = vmatprep.subr.mxu0 %v1497
        %1561 = vmatpush1.msra.mxu0 %v1496
        %1562 = vmatprep.subr.mxu0 %v1493
        %1563 = vmatpush1.msra.mxu0 %v1492
        %1564 = vmatprep.subr.mxu0 %v1489
        %1565 = vmatpush1.msra.mxu0 %v1488
        %1566 = vmatprep.subr.mxu0 %v1485
        %1567 = vmatpush1.msra.mxu0 %v1484
        %1568 = vmatprep.subr.mxu0 %v1481
        %1569 = vmatpush1.msra.mxu0 %v1480
        %1570 = vmatprep.subr.mxu0 %v1477
        %1571 = vmatpush1.msra.mxu0 %v1476
        %1572 = vmatprep.subr.mxu0 0.0
        %1573 = vmatpush2.msra.mxu0 0.0
        %1574 = vmatprep.subr.mxu0 0.0
        %1575 = vmatpush2.msra.mxu0 0.0
        %1576 = vmatprep.subr.mxu0 0.0
        %1577 = vmatpush2.msra.mxu0 0.0
        %1578 = vmatprep.subr.mxu0 0.0
        %1579 = vmatpush2.msra.mxu0 0.0
        %1580 = vmatprep.subr.mxu0 0.0
        %1581 = vmatpush2.msra.mxu0 0.0
        %1582 = vmatprep.subr.mxu0 0.0
        %1583 = vmatpush2.msra.mxu0 0.0
        %1584 = vmatprep.subr.mxu0 0.0
        %1585 = vmatpush2.msra.mxu0 0.0
        %1586 = vmatprep.subr.mxu0 0.0
        %1587 = vmatpush2.msra.mxu0 0.0
        %1588 = vmatprep.subr.mxu0 0.0
        %1589 = vmatpush2.msra.mxu0 0.0
        %1590 = vmatprep.subr.mxu0 0.0
        %1591 = vmatpush2.msra.mxu0 0.0
        %1592 = vmatprep.subr.mxu0 0.0
        %1593 = vmatpush2.msra.mxu0 0.0
        %1594 = vmatprep.subr.mxu0 0.0
        %1595 = vmatpush2.msra.mxu0 0.0
        %1596 = vmatprep.subr.mxu0 0.0
        %1597 = vmatpush2.msra.mxu0 0.0
        %1598 = vmatprep.subr.mxu0 0.0
        %1599 = vmatpush2.msra.mxu0 0.0
        %1600 = vmatprep.subr.mxu0 0.0
        %1601 = vmatpush2.msra.mxu0 0.0
        %1602 = vmatprep.subr.mxu0 0.0
        %1603 = vmatpush2.msra.mxu0 0.0
        %1604 = vmatprep.mubr.f32.mxu0 0.0
        %1605 = vmatmul.mubr.f32.gmra.mxu0 %v1466
        %v1606 = vpop.f32.mrf.mxu0
        %v1607 = vadd.f32 0.0, %v1606
        %v1608 = vpop.f32.mrf.mxu0
        %v1609 = vadd.f32 0.0, %v1608
        %1610 = vdwg.mxu0
        %1611 = vmatprep.subr.mxu0 %v1539
        %1612 = vmatpush1.msra.mxu0 %v1538
        %1613 = vmatprep.subr.mxu0 %v1535
        %1614 = vmatpush1.msra.mxu0 %v1534
        %1615 = vmatprep.subr.mxu0 %v1531
        %1616 = vmatpush1.msra.mxu0 %v1530
        %1617 = vmatprep.subr.mxu0 %v1527
        %1618 = vmatpush1.msra.mxu0 %v1526
        %1619 = vmatprep.subr.mxu0 %v1523
        %1620 = vmatpush1.msra.mxu0 %v1522
        %1621 = vmatprep.subr.mxu0 %v1519
        %1622 = vmatpush1.msra.mxu0 %v1518
        %1623 = vmatprep.subr.mxu0 %v1515
        %1624 = vmatpush1.msra.mxu0 %v1514
        %1625 = vmatprep.subr.mxu0 %v1511
        %1626 = vmatpush1.msra.mxu0 %v1510
        %1627 = vmatprep.subr.mxu0 %v1507
        %1628 = vmatpush1.msra.mxu0 %v1506
        %1629 = vmatprep.subr.mxu0 %v1503
        %1630 = vmatpush1.msra.mxu0 %v1502
        %1631 = vmatprep.subr.mxu0 %v1499
        %1632 = vmatpush1.msra.mxu0 %v1498
        %1633 = vmatprep.subr.mxu0 %v1495
        %1634 = vmatpush1.msra.mxu0 %v1494
        %1635 = vmatprep.subr.mxu0 %v1491
        %1636 = vmatpush1.msra.mxu0 %v1490
        %1637 = vmatprep.subr.mxu0 %v1487
        %1638 = vmatpush1.msra.mxu0 %v1486
        %1639 = vmatprep.subr.mxu0 %v1483
        %1640 = vmatpush1.msra.mxu0 %v1482
        %1641 = vmatprep.subr.mxu0 %v1479
        %1642 = vmatpush1.msra.mxu0 %v1478
        %1643 = vmatprep.subr.mxu0 0.0
        %1644 = vmatpush2.msra.mxu0 0.0
        %1645 = vmatprep.subr.mxu0 0.0
        %1646 = vmatpush2.msra.mxu0 0.0
        %1647 = vmatprep.subr.mxu0 0.0
        %1648 = vmatpush2.msra.mxu0 0.0
        %1649 = vmatprep.subr.mxu0 0.0
        %1650 = vmatpush2.msra.mxu0 0.0
        %1651 = vmatprep.subr.mxu0 0.0
        %1652 = vmatpush2.msra.mxu0 0.0
        %1653 = vmatprep.subr.mxu0 0.0
        %1654 = vmatpush2.msra.mxu0 0.0
        %1655 = vmatprep.subr.mxu0 0.0
        %1656 = vmatpush2.msra.mxu0 0.0
        %1657 = vmatprep.subr.mxu0 0.0
        %1658 = vmatpush2.msra.mxu0 0.0
        %1659 = vmatprep.subr.mxu0 0.0
        %1660 = vmatpush2.msra.mxu0 0.0
        %1661 = vmatprep.subr.mxu0 0.0
        %1662 = vmatpush2.msra.mxu0 0.0
        %1663 = vmatprep.subr.mxu0 0.0
        %1664 = vmatpush2.msra.mxu0 0.0
        %1665 = vmatprep.subr.mxu0 0.0
        %1666 = vmatpush2.msra.mxu0 0.0
        %1667 = vmatprep.subr.mxu0 0.0
        %1668 = vmatpush2.msra.mxu0 0.0
        %1669 = vmatprep.subr.mxu0 0.0
        %1670 = vmatpush2.msra.mxu0 0.0
        %1671 = vmatprep.subr.mxu0 0.0
        %1672 = vmatpush2.msra.mxu0 0.0
        %1673 = vmatprep.subr.mxu0 0.0
        %1674 = vmatpush2.msra.mxu0 0.0
        %1675 = vmatprep.mubr.f32.mxu0 0.0
        %1676 = vmatmul.mubr.f32.gmra.mxu0 %v1466
        %v1677 = vpop.f32.mrf.mxu0
        %v1678 = vadd.f32 0.0, %v1677
        %v1679 = vpop.f32.mrf.mxu0
        %v1680 = vadd.f32 0.0, %v1679
        %1681 = vdwg.mxu0
        %v1682 = vadd.f32 %v1472, %v1607
        %v1683 = vadd.f32 %v1473, %v1609
        %v1684 = vadd.f32 %v1474, %v1678
        %v1685 = vadd.f32 %v1475, %v1680
        %v1686 = vxor.u32 %v1682, 2147483648
        %v1687 = vxor.u32 %v1683, 2147483648
        %v1688 = vmul.f32 %v1686, 1.442695
        %v1689 = vpow.pop %v1688
        %v1690 = vmul.f32 %v1687, 1.442695
        %v1691 = vpow.pop %v1690
        %v1692 = vadd.f32 %v1689, 1.0
        %v1693 = vadd.f32 %v1691, 1.0
        %v1694 = vrcp.pop %v1692
        %v1695 = vmul.f32 1.0, %v1694
        %v1696 = vrcp.pop %v1693
        %v1697 = vmul.f32 1.0, %v1696
        %v1698 = vtanh.pop %v1684
        %v1699 = vxor.u32 %v1685, 2147483648
        %v1700 = vmul.f32 %v1699, 1.442695
        %v1701 = vpow.pop %v1700
        %v1702 = vadd.f32 %v1701, 1.0
        %v1703 = vrcp.pop %v1702
        %v1704 = vmul.f32 1.0, %v1703
        %v1705 = vmul.f32 %v1697, %v1464
        %v1706 = vmul.f32 %v1695, %v1698
        %v1707 = vadd.f32 %v1705, %v1706
        %v1708 = vtanh.pop %v1707
        %v1709 = vmul.f32 %v1704, %v1708
        %s1710 = scalar_lea.vmem [#allocation5], 16
        %1711 = vst [vmem:[%s1710] sm:$0xff] %v1709
        %s1712 = smul.u32 3, 4
        %s1713 = smul.addr %s1712, 8
        %s1714 = scalar_lea.vmem [#allocation4], %s1713
        %v1715 = vld [vmem:[%s1714] sm:$0xff]
        %v1716 = vld [vmem:[%s1714 + $0x8] sm:$0xff]
        %v1717 = vld [vmem:[%s1714 + $0x10] sm:$0xff]
        %v1718 = vld [vmem:[%s1714 + $0x18] sm:$0xff]
        %v1719 = vld [vmem:[#allocation9] sm:$0xff]
        %v1720 = vld [vmem:[#allocation9 + $0x8] sm:$0xff]
        %v1721 = vld [vmem:[#allocation9 + $0x10] sm:$0xff]
        %v1722 = vld [vmem:[#allocation9 + $0x18] sm:$0xff]
        %v1723 = vld [vmem:[#allocation9 + $0x20] sm:$0xff]
        %v1724 = vld [vmem:[#allocation9 + $0x28] sm:$0xff]
        %v1725 = vld [vmem:[#allocation9 + $0x30] sm:$0xff]
        %v1726 = vld [vmem:[#allocation9 + $0x38] sm:$0xff]
        %v1727 = vld [vmem:[#allocation9 + $0x40] sm:$0xff]
        %v1728 = vld [vmem:[#allocation9 + $0x48] sm:$0xff]
        %v1729 = vld [vmem:[#allocation9 + $0x50] sm:$0xff]
        %v1730 = vld [vmem:[#allocation9 + $0x58] sm:$0xff]
        %v1731 = vld [vmem:[#allocation9 + $0x60] sm:$0xff]
        %v1732 = vld [vmem:[#allocation9 + $0x68] sm:$0xff]
        %v1733 = vld [vmem:[#allocation9 + $0x70] sm:$0xff]
        %v1734 = vld [vmem:[#allocation9 + $0x78] sm:$0xff]
        %v1735 = vld [vmem:[#allocation9 + $0x80] sm:$0xff]
        %v1736 = vld [vmem:[#allocation9 + $0x88] sm:$0xff]
        %v1737 = vld [vmem:[#allocation9 + $0x90] sm:$0xff]
        %v1738 = vld [vmem:[#allocation9 + $0x98] sm:$0xff]
        %v1739 = vld [vmem:[#allocation9 + $0xa0] sm:$0xff]
        %v1740 = vld [vmem:[#allocation9 + $0xa8] sm:$0xff]
        %v1741 = vld [vmem:[#allocation9 + $0xb0] sm:$0xff]
        %v1742 = vld [vmem:[#allocation9 + $0xb8] sm:$0xff]
        %v1743 = vld [vmem:[#allocation9 + $0xc0] sm:$0xff]
        %v1744 = vld [vmem:[#allocation9 + $0xc8] sm:$0xff]
        %v1745 = vld [vmem:[#allocation9 + $0xd0] sm:$0xff]
        %v1746 = vld [vmem:[#allocation9 + $0xd8] sm:$0xff]
        %v1747 = vld [vmem:[#allocation9 + $0xe0] sm:$0xff]
        %v1748 = vld [vmem:[#allocation9 + $0xe8] sm:$0xff]
        %v1749 = vld [vmem:[#allocation9 + $0xf0] sm:$0xff]
        %v1750 = vld [vmem:[#allocation9 + $0xf8] sm:$0xff]
        %v1751 = vld [vmem:[#allocation9 + $0x100] sm:$0xff]
        %v1752 = vld [vmem:[#allocation9 + $0x108] sm:$0xff]
        %v1753 = vld [vmem:[#allocation9 + $0x110] sm:$0xff]
        %v1754 = vld [vmem:[#allocation9 + $0x118] sm:$0xff]
        %v1755 = vld [vmem:[#allocation9 + $0x120] sm:$0xff]
        %v1756 = vld [vmem:[#allocation9 + $0x128] sm:$0xff]
        %v1757 = vld [vmem:[#allocation9 + $0x130] sm:$0xff]
        %v1758 = vld [vmem:[#allocation9 + $0x138] sm:$0xff]
        %v1759 = vld [vmem:[#allocation9 + $0x140] sm:$0xff]
        %v1760 = vld [vmem:[#allocation9 + $0x148] sm:$0xff]
        %v1761 = vld [vmem:[#allocation9 + $0x150] sm:$0xff]
        %v1762 = vld [vmem:[#allocation9 + $0x158] sm:$0xff]
        %v1763 = vld [vmem:[#allocation9 + $0x160] sm:$0xff]
        %v1764 = vld [vmem:[#allocation9 + $0x168] sm:$0xff]
        %v1765 = vld [vmem:[#allocation9 + $0x170] sm:$0xff]
        %v1766 = vld [vmem:[#allocation9 + $0x178] sm:$0xff]
        %v1767 = vld [vmem:[#allocation9 + $0x180] sm:$0xff]
        %v1768 = vld [vmem:[#allocation9 + $0x188] sm:$0xff]
        %v1769 = vld [vmem:[#allocation9 + $0x190] sm:$0xff]
        %v1770 = vld [vmem:[#allocation9 + $0x198] sm:$0xff]
        %v1771 = vld [vmem:[#allocation9 + $0x1a0] sm:$0xff]
        %v1772 = vld [vmem:[#allocation9 + $0x1a8] sm:$0xff]
        %v1773 = vld [vmem:[#allocation9 + $0x1b0] sm:$0xff]
        %v1774 = vld [vmem:[#allocation9 + $0x1b8] sm:$0xff]
        %v1775 = vld [vmem:[#allocation9 + $0x1c0] sm:$0xff]
        %v1776 = vld [vmem:[#allocation9 + $0x1c8] sm:$0xff]
        %v1777 = vld [vmem:[#allocation9 + $0x1d0] sm:$0xff]
        %v1778 = vld [vmem:[#allocation9 + $0x1d8] sm:$0xff]
        %v1779 = vld [vmem:[#allocation9 + $0x1e0] sm:$0xff]
        %v1780 = vld [vmem:[#allocation9 + $0x1e8] sm:$0xff]
        %v1781 = vld [vmem:[#allocation9 + $0x1f0] sm:$0xff]
        %v1782 = vld [vmem:[#allocation9 + $0x1f8] sm:$0xff]
        %1783 = vmatprep.subr.mxu0 %v1780
        %1784 = vmatpush1.msra.mxu0 %v1779
        %1785 = vmatprep.subr.mxu0 %v1776
        %1786 = vmatpush1.msra.mxu0 %v1775
        %1787 = vmatprep.subr.mxu0 %v1772
        %1788 = vmatpush1.msra.mxu0 %v1771
        %1789 = vmatprep.subr.mxu0 %v1768
        %1790 = vmatpush1.msra.mxu0 %v1767
        %1791 = vmatprep.subr.mxu0 %v1764
        %1792 = vmatpush1.msra.mxu0 %v1763
        %1793 = vmatprep.subr.mxu0 %v1760
        %1794 = vmatpush1.msra.mxu0 %v1759
        %1795 = vmatprep.subr.mxu0 %v1756
        %1796 = vmatpush1.msra.mxu0 %v1755
        %1797 = vmatprep.subr.mxu0 %v1752
        %1798 = vmatpush1.msra.mxu0 %v1751
        %1799 = vmatprep.subr.mxu0 %v1748
        %1800 = vmatpush1.msra.mxu0 %v1747
        %1801 = vmatprep.subr.mxu0 %v1744
        %1802 = vmatpush1.msra.mxu0 %v1743
        %1803 = vmatprep.subr.mxu0 %v1740
        %1804 = vmatpush1.msra.mxu0 %v1739
        %1805 = vmatprep.subr.mxu0 %v1736
        %1806 = vmatpush1.msra.mxu0 %v1735
        %1807 = vmatprep.subr.mxu0 %v1732
        %1808 = vmatpush1.msra.mxu0 %v1731
        %1809 = vmatprep.subr.mxu0 %v1728
        %1810 = vmatpush1.msra.mxu0 %v1727
        %1811 = vmatprep.subr.mxu0 %v1724
        %1812 = vmatpush1.msra.mxu0 %v1723
        %1813 = vmatprep.subr.mxu0 %v1720
        %1814 = vmatpush1.msra.mxu0 %v1719
        %1815 = vmatprep.subr.mxu0 0.0
        %1816 = vmatpush2.msra.mxu0 0.0
        %1817 = vmatprep.subr.mxu0 0.0
        %1818 = vmatpush2.msra.mxu0 0.0
        %1819 = vmatprep.subr.mxu0 0.0
        %1820 = vmatpush2.msra.mxu0 0.0
        %1821 = vmatprep.subr.mxu0 0.0
        %1822 = vmatpush2.msra.mxu0 0.0
        %1823 = vmatprep.subr.mxu0 0.0
        %1824 = vmatpush2.msra.mxu0 0.0
        %1825 = vmatprep.subr.mxu0 0.0
        %1826 = vmatpush2.msra.mxu0 0.0
        %1827 = vmatprep.subr.mxu0 0.0
        %1828 = vmatpush2.msra.mxu0 0.0
        %1829 = vmatprep.subr.mxu0 0.0
        %1830 = vmatpush2.msra.mxu0 0.0
        %1831 = vmatprep.subr.mxu0 0.0
        %1832 = vmatpush2.msra.mxu0 0.0
        %1833 = vmatprep.subr.mxu0 0.0
        %1834 = vmatpush2.msra.mxu0 0.0
        %1835 = vmatprep.subr.mxu0 0.0
        %1836 = vmatpush2.msra.mxu0 0.0
        %1837 = vmatprep.subr.mxu0 0.0
        %1838 = vmatpush2.msra.mxu0 0.0
        %1839 = vmatprep.subr.mxu0 0.0
        %1840 = vmatpush2.msra.mxu0 0.0
        %1841 = vmatprep.subr.mxu0 0.0
        %1842 = vmatpush2.msra.mxu0 0.0
        %1843 = vmatprep.subr.mxu0 0.0
        %1844 = vmatpush2.msra.mxu0 0.0
        %1845 = vmatprep.subr.mxu0 0.0
        %1846 = vmatpush2.msra.mxu0 0.0
        %1847 = vmatprep.mubr.f32.mxu0 0.0
        %1848 = vmatmul.mubr.f32.gmra.mxu0 %v1709
        %v1849 = vpop.f32.mrf.mxu0
        %v1850 = vadd.f32 0.0, %v1849
        %v1851 = vpop.f32.mrf.mxu0
        %v1852 = vadd.f32 0.0, %v1851
        %1853 = vdwg.mxu0
        %1854 = vmatprep.subr.mxu0 %v1782
        %1855 = vmatpush1.msra.mxu0 %v1781
        %1856 = vmatprep.subr.mxu0 %v1778
        %1857 = vmatpush1.msra.mxu0 %v1777
        %1858 = vmatprep.subr.mxu0 %v1774
        %1859 = vmatpush1.msra.mxu0 %v1773
        %1860 = vmatprep.subr.mxu0 %v1770
        %1861 = vmatpush1.msra.mxu0 %v1769
        %1862 = vmatprep.subr.mxu0 %v1766
        %1863 = vmatpush1.msra.mxu0 %v1765
        %1864 = vmatprep.subr.mxu0 %v1762
        %1865 = vmatpush1.msra.mxu0 %v1761
        %1866 = vmatprep.subr.mxu0 %v1758
        %1867 = vmatpush1.msra.mxu0 %v1757
        %1868 = vmatprep.subr.mxu0 %v1754
        %1869 = vmatpush1.msra.mxu0 %v1753
        %1870 = vmatprep.subr.mxu0 %v1750
        %1871 = vmatpush1.msra.mxu0 %v1749
        %1872 = vmatprep.subr.mxu0 %v1746
        %1873 = vmatpush1.msra.mxu0 %v1745
        %1874 = vmatprep.subr.mxu0 %v1742
        %1875 = vmatpush1.msra.mxu0 %v1741
        %1876 = vmatprep.subr.mxu0 %v1738
        %1877 = vmatpush1.msra.mxu0 %v1737
        %1878 = vmatprep.subr.mxu0 %v1734
        %1879 = vmatpush1.msra.mxu0 %v1733
        %1880 = vmatprep.subr.mxu0 %v1730
        %1881 = vmatpush1.msra.mxu0 %v1729
        %1882 = vmatprep.subr.mxu0 %v1726
        %1883 = vmatpush1.msra.mxu0 %v1725
        %1884 = vmatprep.subr.mxu0 %v1722
        %1885 = vmatpush1.msra.mxu0 %v1721
        %1886 = vmatprep.subr.mxu0 0.0
        %1887 = vmatpush2.msra.mxu0 0.0
        %1888 = vmatprep.subr.mxu0 0.0
        %1889 = vmatpush2.msra.mxu0 0.0
        %1890 = vmatprep.subr.mxu0 0.0
        %1891 = vmatpush2.msra.mxu0 0.0
        %1892 = vmatprep.subr.mxu0 0.0
        %1893 = vmatpush2.msra.mxu0 0.0
        %1894 = vmatprep.subr.mxu0 0.0
        %1895 = vmatpush2.msra.mxu0 0.0
        %1896 = vmatprep.subr.mxu0 0.0
        %1897 = vmatpush2.msra.mxu0 0.0
        %1898 = vmatprep.subr.mxu0 0.0
        %1899 = vmatpush2.msra.mxu0 0.0
        %1900 = vmatprep.subr.mxu0 0.0
        %1901 = vmatpush2.msra.mxu0 0.0
        %1902 = vmatprep.subr.mxu0 0.0
        %1903 = vmatpush2.msra.mxu0 0.0
        %1904 = vmatprep.subr.mxu0 0.0
        %1905 = vmatpush2.msra.mxu0 0.0
        %1906 = vmatprep.subr.mxu0 0.0
        %1907 = vmatpush2.msra.mxu0 0.0
        %1908 = vmatprep.subr.mxu0 0.0
        %1909 = vmatpush2.msra.mxu0 0.0
        %1910 = vmatprep.subr.mxu0 0.0
        %1911 = vmatpush2.msra.mxu0 0.0
        %1912 = vmatprep.subr.mxu0 0.0
        %1913 = vmatpush2.msra.mxu0 0.0
        %1914 = vmatprep.subr.mxu0 0.0
        %1915 = vmatpush2.msra.mxu0 0.0
        %1916 = vmatprep.subr.mxu0 0.0
        %1917 = vmatpush2.msra.mxu0 0.0
        %1918 = vmatprep.mubr.f32.mxu0 0.0
        %1919 = vmatmul.mubr.f32.gmra.mxu0 %v1709
        %v1920 = vpop.f32.mrf.mxu0
        %v1921 = vadd.f32 0.0, %v1920
        %v1922 = vpop.f32.mrf.mxu0
        %v1923 = vadd.f32 0.0, %v1922
        %1924 = vdwg.mxu0
        %v1925 = vadd.f32 %v1715, %v1850
        %v1926 = vadd.f32 %v1716, %v1852
        %v1927 = vadd.f32 %v1717, %v1921
        %v1928 = vadd.f32 %v1718, %v1923
        %v1929 = vxor.u32 %v1925, 2147483648
        %v1930 = vxor.u32 %v1926, 2147483648
        %v1931 = vmul.f32 %v1929, 1.442695
        %v1932 = vpow.pop %v1931
        %v1933 = vmul.f32 %v1930, 1.442695
        %v1934 = vpow.pop %v1933
        %v1935 = vadd.f32 %v1932, 1.0
        %v1936 = vadd.f32 %v1934, 1.0
        %v1937 = vrcp.pop %v1935
        %v1938 = vmul.f32 1.0, %v1937
        %v1939 = vrcp.pop %v1936
        %v1940 = vmul.f32 1.0, %v1939
        %v1941 = vtanh.pop %v1927
        %v1942 = vxor.u32 %v1928, 2147483648
        %v1943 = vmul.f32 %v1942, 1.442695
        %v1944 = vpow.pop %v1943
        %v1945 = vadd.f32 %v1944, 1.0
        %v1946 = vrcp.pop %v1945
        %v1947 = vmul.f32 1.0, %v1946
        %v1948 = vmul.f32 %v1940, %v1707
        %v1949 = vmul.f32 %v1938, %v1941
        %v1950 = vadd.f32 %v1948, %v1949
        %v1951 = vtanh.pop %v1950
        %v1952 = vmul.f32 %v1947, %v1951
        %s1953 = scalar_lea.vmem [#allocation5], 24
        %1954 = vst [vmem:[%s1953] sm:$0xff] %v1952
        %1955 = vst [vmem:[#allocation2] sm:$0xff] %v1952
        %1956 = vst [vmem:[#allocation3] sm:$0xff] %v1950
        %p1957 = scmp.eq.s32.totalorder %s39, 1
        // Predicated region
        $region77: #{tpu_custom_call.1} parent=59 // pred_check
          %p1958 = pneg %p1957
        $region78: #{tpu_custom_call.1} parent=59 // pred_check_branch
          %1960 = sbr.rel (%p1958) target = $region80
        $region79: #{tpu_custom_call.1} parent=59 // pred_region
          %1961 = vst [vmem:[#allocation15] sm:$0xff] %v1952
          %1962 = vst [vmem:[#allocation16] sm:$0xff] %v1950
        $region80: #{tpu_custom_call.1} parent=59 // pred_fallthru
          _
        %v1963 = vld [vmem:[#allocation5] sm:$0xff]
        %v1964 = vld [vmem:[#allocation5 + $0x8] sm:$0xff]
        %v1965 = vld [vmem:[#allocation5 + $0x10] sm:$0xff]
        %v1966 = vld [vmem:[#allocation5 + $0x18] sm:$0xff]
        %v1967 = vld [vmem:[#allocation11] sm:$0xff]
        %v1968 = vld [vmem:[#allocation11 + $0x8] sm:$0xff]
        %v1969 = vld [vmem:[#allocation11 + $0x10] sm:$0xff]
        %v1970 = vld [vmem:[#allocation11 + $0x18] sm:$0xff]
        %v1971 = vld [vmem:[#allocation11 + $0x20] sm:$0xff]
        %v1972 = vld [vmem:[#allocation11 + $0x28] sm:$0xff]
        %v1973 = vld [vmem:[#allocation11 + $0x30] sm:$0xff]
        %v1974 = vld [vmem:[#allocation11 + $0x38] sm:$0xff]
        %v1975 = vld [vmem:[#allocation11 + $0x40] sm:$0xff]
        %v1976 = vld [vmem:[#allocation11 + $0x48] sm:$0xff]
        %v1977 = vld [vmem:[#allocation11 + $0x50] sm:$0xff]
        %v1978 = vld [vmem:[#allocation11 + $0x58] sm:$0xff]
        %v1979 = vld [vmem:[#allocation11 + $0x60] sm:$0xff]
        %v1980 = vld [vmem:[#allocation11 + $0x68] sm:$0xff]
        %v1981 = vld [vmem:[#allocation11 + $0x70] sm:$0xff]
        %v1982 = vld [vmem:[#allocation11 + $0x78] sm:$0xff]
        %v1983 = vld [vmem:[%s9] sm:$0x1]
        %v1985 = vlaneseq
        %v1986 = vshrl.u32 %v1985, 7
        %v1987 = vsub.s32 0, %v1986
        %v1988 = vrot.slane %v1983, %v1987
        %1990 = vmatprep.subr.mxu0 0.0
        %1991 = vmatpush1.msra.mxu0 %v1982
        %1992 = vmatprep.subr.mxu0 0.0
        %1993 = vmatpush1.msra.mxu0 %v1981
        %1994 = vmatprep.subr.mxu0 0.0
        %1995 = vmatpush1.msra.mxu0 %v1980
        %1996 = vmatprep.subr.mxu0 0.0
        %1997 = vmatpush1.msra.mxu0 %v1979
        %1998 = vmatprep.subr.mxu0 0.0
        %1999 = vmatpush1.msra.mxu0 %v1978
        %2000 = vmatprep.subr.mxu0 0.0
        %2001 = vmatpush1.msra.mxu0 %v1977
        %2002 = vmatprep.subr.mxu0 0.0
        %2003 = vmatpush1.msra.mxu0 %v1976
        %2004 = vmatprep.subr.mxu0 0.0
        %2005 = vmatpush1.msra.mxu0 %v1975
        %2006 = vmatprep.subr.mxu0 0.0
        %2007 = vmatpush1.msra.mxu0 %v1974
        %2008 = vmatprep.subr.mxu0 0.0
        %2009 = vmatpush1.msra.mxu0 %v1973
        %2010 = vmatprep.subr.mxu0 0.0
        %2011 = vmatpush1.msra.mxu0 %v1972
        %2012 = vmatprep.subr.mxu0 0.0
        %2013 = vmatpush1.msra.mxu0 %v1971
        %2014 = vmatprep.subr.mxu0 0.0
        %2015 = vmatpush1.msra.mxu0 %v1970
        %2016 = vmatprep.subr.mxu0 0.0
        %2017 = vmatpush1.msra.mxu0 %v1969
        %2018 = vmatprep.subr.mxu0 0.0
        %2019 = vmatpush1.msra.mxu0 %v1968
        %2020 = vmatprep.subr.mxu0 0.0
        %2021 = vmatpush1.msra.mxu0 %v1967
        %2022 = vmatprep.subr.mxu0 0.0
        %2023 = vmatpush2.msra.mxu0 0.0
        %2024 = vmatprep.subr.mxu0 0.0
        %2025 = vmatpush2.msra.mxu0 0.0
        %2026 = vmatprep.subr.mxu0 0.0
        %2027 = vmatpush2.msra.mxu0 0.0
        %2028 = vmatprep.subr.mxu0 0.0
        %2029 = vmatpush2.msra.mxu0 0.0
        %2030 = vmatprep.subr.mxu0 0.0
        %2031 = vmatpush2.msra.mxu0 0.0
        %2032 = vmatprep.subr.mxu0 0.0
        %2033 = vmatpush2.msra.mxu0 0.0
        %2034 = vmatprep.subr.mxu0 0.0
        %2035 = vmatpush2.msra.mxu0 0.0
        %2036 = vmatprep.subr.mxu0 0.0
        %2037 = vmatpush2.msra.mxu0 0.0
        %2038 = vmatprep.subr.mxu0 0.0
        %2039 = vmatpush2.msra.mxu0 0.0
        %2040 = vmatprep.subr.mxu0 0.0
        %2041 = vmatpush2.msra.mxu0 0.0
        %2042 = vmatprep.subr.mxu0 0.0
        %2043 = vmatpush2.msra.mxu0 0.0
        %2044 = vmatprep.subr.mxu0 0.0
        %2045 = vmatpush2.msra.mxu0 0.0
        %2046 = vmatprep.subr.mxu0 0.0
        %2047 = vmatpush2.msra.mxu0 0.0
        %2048 = vmatprep.subr.mxu0 0.0
        %2049 = vmatpush2.msra.mxu0 0.0
        %2050 = vmatprep.subr.mxu0 0.0
        %2051 = vmatpush2.msra.mxu0 0.0
        %2052 = vmatprep.subr.mxu0 0.0
        %2053 = vmatpush2.msra.mxu0 0.0
        %2054 = vmatprep.mubr.f32.mxu0 0.0
        %2055 = vmatmul.mubr.f32.gmra.mxu0 %v1963
        %v2056 = vpop.f32.mrf.mxu0
        %v2057 = vadd.f32 %v1988, %v2056
        %v2058 = vpop.f32.mrf.mxu0
        %2059 = vmatprep.mubr.f32.mxu0 0.0
        %2060 = vmatmul.mubr.f32.gmra.mxu0 %v1964
        %v2061 = vpop.f32.mrf.mxu0
        %v2062 = vadd.f32 %v1988, %v2061
        %v2063 = vpop.f32.mrf.mxu0
        %2064 = vmatprep.mubr.f32.mxu0 0.0
        %2065 = vmatmul.mubr.f32.gmra.mxu0 %v1965
        %v2066 = vpop.f32.mrf.mxu0
        %v2067 = vadd.f32 %v1988, %v2066
        %v2068 = vpop.f32.mrf.mxu0
        %2069 = vmatprep.mubr.f32.mxu0 0.0
        %2070 = vmatmul.mubr.f32.gmra.mxu0 %v1966
        %v2071 = vpop.f32.mrf.mxu0
        %v2072 = vadd.f32 %v1988, %v2071
        %v2073 = vpop.f32.mrf.mxu0
        %2074 = vdwg.mxu0
        %2075 = vst [vmem:[%s546] sm:$0xff] %v2057
        %2076 = vst [vmem:[%s546 + $0x8] sm:$0xff] %v2062
        %2077 = vst [vmem:[%s546 + $0x10] sm:$0xff] %v2067
        %2078 = vst [vmem:[%s546 + $0x18] sm:$0xff] %v2072
        %s2079 = sand.u32 %s287, 1
        %s2080 = scalar_lea.sflag [#allocation8], %s2079
        %s2081 = sand.u32 %s287, 1
        %s2082 = smul.addr %s2081, 32
        %s2083 = scalar_lea.vmem [#allocation12], %s2082
        %s2084 = sand.u32 %s34, 1
        %s2085 = scalar_lea.sflag [#allocation14], %s2084
        %s2086 = sand.u32 %s317, 1
        %s2087 = smul.addr %s2086, 32
        %s2088 = scalar_lea.vmem [#allocation13], %s2087
        // Predicated region
        $region81: #{tpu_custom_call.1} parent=59 // pred_check
          %p2089 = pneg %p297
        $region82: #{tpu_custom_call.1} parent=59 // pred_check_branch
          %2091 = sbr.rel (%p2089) target = $region84
        $region83: #{tpu_custom_call.1} parent=59 // pred_region
          %s2092 = smul.u32 %s38, 2
          %s2093 = sadd.s32 %s2092, %s39
          %s2094 = smul.u32 4, %s2093
          %s2096 = ssub.s32 512, 512
          %2097 = vsyncadd %s2080, %s2096
          %s2098 = smul.addr %s2094, 128
          %s2099 = scalar_lea.hbm %s10, %s2098
          %s2100 = sshll.u32 %s2083, 4
          %s2101 = int_to_ptr.vmem [resolvable:$true] %s2100
          %2106 = dma.vmem_to_hbm [thread:$0]  %s2101, 512, %s2099, %s2080, 128, 128, 8
        $region84: #{tpu_custom_call.1} parent=59 // pred_fallthru
          _
        // Predicated region
        $region85: #{tpu_custom_call.1} parent=59 // pred_check
          %p2107 = pneg %p327
        $region86: #{tpu_custom_call.1} parent=59 // pred_check_branch
          %2109 = sbr.rel (%p2107) target = $region88
        $region87: #{tpu_custom_call.1} parent=59 // pred_region
          %s2110 = smul.u32 %s38, 2
          %s2111 = sadd.s32 %s2110, %s39
          %s2112 = smul.u32 4, %s2111
          %s2114 = ssub.s32 512, 512
          %2115 = vsyncadd %s2085, %s2114
          %s2116 = smul.addr %s2112, 128
          %s2117 = scalar_lea.hbm %s11, %s2116
          %s2118 = sshll.u32 %s2088, 4
          %s2119 = int_to_ptr.vmem [resolvable:$true] %s2118
          %2124 = dma.vmem_to_hbm [thread:$0]  %s2119, 512, %s2117, %s2085, 128, 128, 8
        $region88: #{tpu_custom_call.1} parent=59 // pred_fallthru
          _
        // Predicated region
        $region89: #{tpu_custom_call.1} parent=59 // pred_check
          %p2125 = pneg %p353
        $region90: #{tpu_custom_call.1} parent=59 // pred_check_branch
          %2127 = sbr.rel (%p2125) target = $region92
        $region91: #{tpu_custom_call.1} parent=59 // pred_region
          %s2129 = ssub.s32 128, 128
          %2130 = vsyncadd [#allocation14], %s2129
          %s2131 = smul.addr %s38, 128
          %s2132 = scalar_lea.hbm %s12, %s2131
          %s2134 = sshll.u32 [#allocation15], 4
          %s2135 = int_to_ptr.vmem [resolvable:$true] %s2134
          %2137 = dma.vmem_to_hbm [thread:$0]  %s2135, 128, %s2132, [#allocation14]
        $region92: #{tpu_custom_call.1} parent=59 // pred_fallthru
          _
        // Predicated region
        $region93: #{tpu_custom_call.1} parent=59 // pred_check
          %p2138 = pneg %p379
        $region94: #{tpu_custom_call.1} parent=59 // pred_check_branch
          %2140 = sbr.rel (%p2138) target = $region96
        $region95: #{tpu_custom_call.1} parent=59 // pred_region
          %s2142 = ssub.s32 128, 128
          %2143 = vsyncadd [#allocation17], %s2142
          %s2144 = smul.addr %s38, 128
          %s2145 = scalar_lea.hbm %s13, %s2144
          %s2147 = sshll.u32 [#allocation16], 4
          %s2148 = int_to_ptr.vmem [resolvable:$true] %s2147
          %2150 = dma.vmem_to_hbm [thread:$0]  %s2148, 128, %s2145, [#allocation17]
        $region96: #{tpu_custom_call.1} parent=59 // pred_fallthru
          _
        // Predicated region
        $region97: #{tpu_custom_call.1} parent=59 // pred_check
          %p2151 = pneg %p353
        $region98: #{tpu_custom_call.1} parent=59 // pred_check_branch
          %2153 = sbr.rel (%p2151) target = $region100
        $region99: #{tpu_custom_call.1} parent=59 // pred_region
          %2154 = dma.done [#allocation14], 128
        $region100: #{tpu_custom_call.1} parent=59 // pred_fallthru
          _
        // Predicated region
        $region101: #{tpu_custom_call.1} parent=59 // pred_check
          %p2155 = pneg %p379
        $region102: #{tpu_custom_call.1} parent=59 // pred_check_branch
          %2157 = sbr.rel (%p2155) target = $region104
        $region103: #{tpu_custom_call.1} parent=59 // pred_region
          %2158 = dma.done [#allocation17], 128
        $region104: #{tpu_custom_call.1} parent=59 // pred_fallthru
          _
      $region60: #{tpu_custom_call.1} parent=5 // pred_fallthru
        _
      %p2159 = scmp.le.s32.totalorder 2, %s29
      // Predicated region
      $region105: #{tpu_custom_call.1} parent=5 // pred_check
        %p2160 = pneg %p2159
      $region106: #{tpu_custom_call.1} parent=5 // pred_check_branch
        %2162 = sbr.rel (%p2160) target = $region108
      $region107: #{tpu_custom_call.1} parent=5 // pred_region
        %s2163 = ssub.s32 %s29, 2
        // Predicated region
        $region109: #{tpu_custom_call.1} parent=107 // pred_check
          %p2164 = pneg %p303
        $region110: #{tpu_custom_call.1} parent=107 // pred_check_branch
          %2166 = sbr.rel (%p2164) target = $region112
        $region111: #{tpu_custom_call.1} parent=107 // pred_region
          %s2167 = sand.u32 %s288, 1
          %s2168 = scalar_lea.sflag [#allocation8], %s2167
          %s2169 = sand.u32 %s288, 1
          %s2170 = smul.addr %s2169, 32
          %s2171 = scalar_lea.vmem [#allocation12], %s2170
          %2172 = dma.done %s2168, 512
        $region112: #{tpu_custom_call.1} parent=107 // pred_fallthru
          _
        // Predicated region
        $region113: #{tpu_custom_call.1} parent=107 // pred_check
          %p2173 = pneg %p333
        $region114: #{tpu_custom_call.1} parent=107 // pred_check_branch
          %2175 = sbr.rel (%p2173) target = $region116
        $region115: #{tpu_custom_call.1} parent=107 // pred_region
          %s2176 = sand.u32 %s35, 1
          %s2177 = scalar_lea.sflag [#allocation14], %s2176
          %s2178 = sand.u32 %s318, 1
          %s2179 = smul.addr %s2178, 32
          %s2180 = scalar_lea.vmem [#allocation13], %s2179
          %2181 = dma.done %s2177, 512
        $region116: #{tpu_custom_call.1} parent=107 // pred_fallthru
          _
      $region108: #{tpu_custom_call.1} parent=5 // pred_fallthru
        _
    $region6: #{tpu_custom_call.1} parent=1 // loop_footer
      %s33 = sadd.s32 1, %s29
    $region7: #{tpu_custom_call.1} parent=1 // loop_footer_branch
      %28 = sbr.rel target = $region3
    $region8: #{tpu_custom_call.1} parent=1 // loop_exit
      _
    %2182 = vsyncpa [#allocation7], 1
    %s2183 = scalar_lea.sflag [#allocation7], 1
    %2184 = vsyncpa %s2183, 1
    %2185 = vsyncpa [#allocation10], 1
    %2186 = vsyncpa [#allocation8], 1
    %s2187 = scalar_lea.sflag [#allocation8], 1
    %2188 = vsyncpa %s2187, 1
    %2189 = vsyncpa [#allocation14], 1
    %s2190 = scalar_lea.sflag [#allocation14], 1
    %2191 = vsyncpa %s2190, 1
    %2192 = vsyncpa [#allocation17], 1

</llo_original>
